<compile_context>
chip_gen: v7x
topology: tpu7x:2x2x1
jax: 0.10.0
libtpu: 0.0.40
codegen_flags: <defaults>
</compile_context>

<pallas_src>
import math
from functools import partial

import numpy as np
import jax
import jax.numpy as jnp
from jax import lax
from jax.experimental import pallas as pl
from jax.experimental.pallas import tpu as pltpu


# ---------------------------------------------------------------------------
# Positional encoding (constant, computed host-side once per shape)
# ---------------------------------------------------------------------------
def _positional_encoding(num_node, hid_dim):
    position = np.arange(num_node, dtype=np.float32)[:, None]
    div_term = np.exp(np.arange(0, hid_dim, 2, dtype=np.float32)
                      * (-math.log(10000.0) / hid_dim))
    pe = np.zeros((num_node, hid_dim), dtype=np.float32)
    pe[:, 0::2] = np.sin(position * div_term)
    pe[:, 1::2] = np.cos(position * div_term)
    return jnp.asarray(pe)


# ---------------------------------------------------------------------------
# Fused SAPL kernel
# ---------------------------------------------------------------------------
def sapl_kernel(x_ref, w_in_ref, bpe_ref, w_qkv_ref, b_qkv_ref,
                wf1_ref, bf1_ref, wf2_ref, bf2_ref,
                g1_ref, be1_ref, g2_ref, be2_ref,
                out_ref, mean_attn_ref, mask_ref,
                *, B, N, H, n_head, alpha, pr_iters):
    d_k = H // n_head
    inv_sqrt_dk = 1.0 / math.sqrt(d_k)

    # ---- front end: in_fc + positional enc + fused Q/K/V (batch folded into M)
    x = x_ref[...]                                                    # (B*N, F)
    xh = jnp.dot(x, w_in_ref[...],
                 preferred_element_type=jnp.float32) + bpe_ref[...]   # (B*N, H)
    qkv = jnp.dot(xh, w_qkv_ref[...],
                  preferred_element_type=jnp.float32) + b_qkv_ref[...]  # (B*N, 3H)

    # ---- per-(batch, head) softmax attention; accumulate batch/head mean
    attn_list = []        # attn_list[b][h] : (N, N)
    v_list = []           # v_list[b]       : (N, H)
    attn_sum = jnp.zeros((N, N), jnp.float32)
    for b in range(B):
        q_b = qkv[b * N:(b + 1) * N, 0:H]
        k_b = qkv[b * N:(b + 1) * N, H:2 * H]
        v_b = qkv[b * N:(b + 1) * N, 2 * H:3 * H]
        v_list.append(v_b)
        heads = []
        for h in range(n_head):
            qh = q_b[:, h * d_k:(h + 1) * d_k]
            kh = k_b[:, h * d_k:(h + 1) * d_k]
            s = lax.dot_general(qh, kh, (((1,), (1,)), ((), ())),
                                preferred_element_type=jnp.float32) * inv_sqrt_dk
            m = jnp.max(s, axis=-1, keepdims=True)
            p = jnp.exp(s - m)
            denom = jnp.sum(p, axis=-1, keepdims=True)
            attn = p * pl.reciprocal(denom, approx=True)              # (N, N)
            heads.append(attn)
            attn_sum = attn_sum + attn
        attn_list.append(heads)

    mean_attn = attn_sum * (1.0 / float(B * n_head))                  # (N, N)
    mean_attn_ref[...] = mean_attn

    # ---- PageRank power iteration on the mean attention graph (on-device)
    rowsum = jnp.sum(mean_attn, axis=-1, keepdims=True)               # (N, 1)
    rowsum = jnp.where(rowsum == 0.0, 1.0, rowsum)
    P = mean_attn / rowsum                                            # row-stochastic

    pr0 = jnp.full((1, N), 1.0 / N, jnp.float32)

    def pr_body(_, pvec):
        return (alpha * jnp.dot(pvec, P, preferred_element_type=jnp.float32)
                + (1.0 - alpha) / N)

    pr = lax.fori_loop(0, pr_iters, pr_body, pr0)                     # (1, N)

    # ---- lower-median node selection (torch.median semantics), via masks only
    prb = jnp.broadcast_to(pr, (N, N))                                # [i, j] = pr[j]
    # rank[0, j] = #{ i : pr[i] < pr[j] }
    rank = jnp.sum((prb.T < prb).astype(jnp.float32), axis=0, keepdims=True)
    median_rank = float((N - 1) // 2)
    eligible = jnp.where(rank <= median_rank, pr, -jnp.inf)
    median_val = jnp.max(eligible)                                    # lower median
    maskf = (pr <= median_val).astype(jnp.float32)                    # 1.0 -> deleted node
    keepf = 1.0 - maskf
    mask_ref[...] = maskf

    # ---- back end: masked attention output, residual, LN1, FF, LN2
    x_rows = []
    for b in range(B):
        heads_out = []
        for h in range(n_head):
            attn_m = attn_list[b][h] * keepf                          # zero deleted keys
            vh = v_list[b][:, h * d_k:(h + 1) * d_k]
            heads_out.append(jnp.dot(attn_m, vh,
                                     preferred_element_type=jnp.float32))
        attn_out = heads_out[0] if n_head == 1 else jnp.concatenate(heads_out, axis=1)
        x_rows.append(xh[b * N:(b + 1) * N, :] + attn_out)            # residual
    x_cat = x_rows[0] if B == 1 else jnp.concatenate(x_rows, axis=0)  # (B*N, H)

    def layer_norm(z, g, be):
        mu = jnp.mean(z, axis=-1, keepdims=True)
        var = jnp.mean((z - mu) ** 2, axis=-1, keepdims=True)
        return (z - mu) * lax.rsqrt(var + 1e-5) * g + be

    x_cat = layer_norm(x_cat, g1_ref[...], be1_ref[...])
    ff = jnp.maximum(jnp.dot(x_cat, wf1_ref[...],
                             preferred_element_type=jnp.float32) + bf1_ref[...], 0.0)
    ff = jnp.dot(ff, wf2_ref[...], preferred_element_type=jnp.float32) + bf2_ref[...]
    x_cat = layer_norm(x_cat + ff, g2_ref[...], be2_ref[...])

    # ---- pagerank-score weighted sum over the kept nodes (per batch)
    w_pr = pr * keepf                                                 # (1, N)
    outs = [jnp.dot(w_pr, x_cat[b * N:(b + 1) * N, :],
                    preferred_element_type=jnp.float32) for b in range(B)]
    out_ref[...] = outs[0] if B == 1 else jnp.concatenate(outs, axis=0)  # (B, H)


# ---------------------------------------------------------------------------
# Wrapper: param fusion + single pallas_call
# ---------------------------------------------------------------------------
def sapl_forward(x, params, n_head=1, pr_iters=100, alpha=0.85):
    B, N, F = x.shape
    H = params["w_in"].shape[1]                                       # F // 2 * 2
    pe = _positional_encoding(N, H)

    x2 = x.reshape(B * N, F)
    bpe = jnp.tile(pe + params["b_in"], (B, 1))                       # (B*N, H)
    w_qkv = jnp.concatenate([params["wq"], params["wk"], params["wv"]], axis=1)
    b_qkv = jnp.concatenate([params["bq"], params["bk"], params["bv"]], axis=1)

    kernel = partial(sapl_kernel, B=B, N=N, H=H, n_head=n_head,
                     alpha=alpha, pr_iters=pr_iters)

    out, mean_attn, maskf = pl.pallas_call(
        kernel,
        out_shape=(
            jax.ShapeDtypeStruct((B, H), jnp.float32),
            jax.ShapeDtypeStruct((N, N), jnp.float32),
            jax.ShapeDtypeStruct((1, N), jnp.float32),
        ),
        grid=(1,),
        in_specs=[
            pl.BlockSpec((B * N, F), lambda i: (0, 0)),
            pl.BlockSpec((F, H), lambda i: (0, 0)),
            pl.BlockSpec((B * N, H), lambda i: (0, 0)),
            pl.BlockSpec((H, 3 * H), lambda i: (0, 0)),
            pl.BlockSpec((1, 3 * H), lambda i: (0, 0)),
            pl.BlockSpec((H, H), lambda i: (0, 0)),
            pl.BlockSpec((1, H), lambda i: (0, 0)),
            pl.BlockSpec((H, H), lambda i: (0, 0)),
            pl.BlockSpec((1, H), lambda i: (0, 0)),
            pl.BlockSpec((1, H), lambda i: (0, 0)),
            pl.BlockSpec((1, H), lambda i: (0, 0)),
            pl.BlockSpec((1, H), lambda i: (0, 0)),
            pl.BlockSpec((1, H), lambda i: (0, 0)),
        ],
        out_specs=(
            pl.BlockSpec((B, H), lambda i: (0, 0)),
            pl.BlockSpec((N, N), lambda i: (0, 0)),
            pl.BlockSpec((1, N), lambda i: (0, 0)),
        ),
        compiler_params=pltpu.CompilerParams(dimension_semantics=("arbitrary",)),
    )(x2, params["w_in"], bpe, w_qkv, b_qkv,
      params["wf1"], params["bf1"], params["wf2"], params["bf2"],
      params["g1"], params["be1"], params["g2"], params["be2"])

    mask = maskf[0] > 0.5                                             # True -> deleted node
    return out, mean_attn, mask


# ---------------------------------------------------------------------------
# Deterministic parameter init (PyTorch nn.Linear default fan-in uniform)
# ---------------------------------------------------------------------------
def _uniform(key, shape, bound):
    return jax.random.uniform(key, shape, jnp.float32, -bound, bound)


def init_linear(key, in_dim, out_dim):
    k1, k2 = jax.random.split(key)
    bound = 1.0 / math.sqrt(in_dim)
    return _uniform(k1, (in_dim, out_dim), bound), _uniform(k2, (1, out_dim), bound)


def init_sapl_params(key, feature_dim):
    H = feature_dim // 2 * 2
    ks = jax.random.split(key, 6)
    p = {}
    p["w_in"], p["b_in"] = init_linear(ks[0], feature_dim, H)
    p["wq"], p["bq"] = init_linear(ks[1], H, H)
    p["wk"], p["bk"] = init_linear(ks[2], H, H)
    p["wv"], p["bv"] = init_linear(ks[3], H, H)
    p["wf1"], p["bf1"] = init_linear(ks[4], H, H)
    p["wf2"], p["bf2"] = init_linear(ks[5], H, H)
    p["g1"] = jnp.ones((1, H), jnp.float32)
    p["be1"] = jnp.zeros((1, H), jnp.float32)
    p["g2"] = jnp.ones((1, H), jnp.float32)
    p["be2"] = jnp.zeros((1, H), jnp.float32)
    return p


# ---------------------------------------------------------------------------
if __name__ == "__main__":
    key = jax.random.PRNGKey(0)
    kx, kp = jax.random.split(key)

    batch, num_node, feature_dim, n_head = 2, 16, 16, 2
    hid_dim = feature_dim // 2 * 2

    x = jax.random.normal(kx, (batch, num_node, feature_dim), jnp.float32)
    params = init_sapl_params(kp, feature_dim)

    fwd = jax.jit(partial(sapl_forward, n_head=n_head))
    out, mean_attn, mask = fwd(x, params)
    jax.block_until_ready((out, mean_attn, mask))

    assert out.shape == (batch, hid_dim)
    assert mean_attn.shape == (num_node, num_node)
    assert mask.shape == (num_node,)
    assert bool(jnp.all(jnp.isfinite(out)))
    print("KERNEL_OK")
</pallas_src>

<mosaic_0001>
module attributes {stable_mosaic.version = 11 : i64} {
  func.func @sapl_kernel(%arg0: i32, %arg1: memref<32x16xf32, #tpu.memory_space<vmem>>, %arg2: memref<16x16xf32, #tpu.memory_space<vmem>>, %arg3: memref<32x16xf32, #tpu.memory_space<vmem>>, %arg4: memref<16x48xf32, #tpu.memory_space<vmem>>, %arg5: memref<1x48xf32, #tpu.memory_space<vmem>>, %arg6: memref<16x16xf32, #tpu.memory_space<vmem>>, %arg7: memref<1x16xf32, #tpu.memory_space<vmem>>, %arg8: memref<16x16xf32, #tpu.memory_space<vmem>>, %arg9: memref<1x16xf32, #tpu.memory_space<vmem>>, %arg10: memref<1x16xf32, #tpu.memory_space<vmem>>, %arg11: memref<1x16xf32, #tpu.memory_space<vmem>>, %arg12: memref<1x16xf32, #tpu.memory_space<vmem>>, %arg13: memref<1x16xf32, #tpu.memory_space<vmem>>, %arg14: memref<2x16xf32, #tpu.memory_space<vmem>>, %arg15: memref<16x16xf32, #tpu.memory_space<vmem>>, %arg16: memref<1x16xf32, #tpu.memory_space<vmem>>) attributes {dimension_semantics = [#tpu.dimension_semantics<arbitrary>], iteration_bounds = array<i64: 1>, scalar_prefetch = 0 : i64, scratch_operands = 0 : i64, tpu.core_type = #tpu.core_type<tc>, window_params = [{pipeline_mode = #tpu.pipeline_mode<synchronous>, transform_indices = @transform_0, window_bounds = array<i64: 32, 16>}, {pipeline_mode = #tpu.pipeline_mode<synchronous>, transform_indices = @transform_1, window_bounds = array<i64: 16, 16>}, {pipeline_mode = #tpu.pipeline_mode<synchronous>, transform_indices = @transform_2, window_bounds = array<i64: 32, 16>}, {pipeline_mode = #tpu.pipeline_mode<synchronous>, transform_indices = @transform_3, window_bounds = array<i64: 16, 48>}, {pipeline_mode = #tpu.pipeline_mode<synchronous>, transform_indices = @transform_4, window_bounds = array<i64: 1, 48>}, {pipeline_mode = #tpu.pipeline_mode<synchronous>, transform_indices = @transform_5, window_bounds = array<i64: 16, 16>}, {pipeline_mode = #tpu.pipeline_mode<synchronous>, transform_indices = @transform_6, window_bounds = array<i64: 1, 16>}, {pipeline_mode = #tpu.pipeline_mode<synchronous>, transform_indices = @transform_7, window_bounds = array<i64: 16, 16>}, {pipeline_mode = #tpu.pipeline_mode<synchronous>, transform_indices = @transform_8, window_bounds = array<i64: 1, 16>}, {pipeline_mode = #tpu.pipeline_mode<synchronous>, transform_indices = @transform_9, window_bounds = array<i64: 1, 16>}, {pipeline_mode = #tpu.pipeline_mode<synchronous>, transform_indices = @transform_10, window_bounds = array<i64: 1, 16>}, {pipeline_mode = #tpu.pipeline_mode<synchronous>, transform_indices = @transform_11, window_bounds = array<i64: 1, 16>}, {pipeline_mode = #tpu.pipeline_mode<synchronous>, transform_indices = @transform_12, window_bounds = array<i64: 1, 16>}, {pipeline_mode = #tpu.pipeline_mode<synchronous>, transform_indices = @transform_13, window_bounds = array<i64: 2, 16>}, {pipeline_mode = #tpu.pipeline_mode<synchronous>, transform_indices = @transform_14, window_bounds = array<i64: 16, 16>}, {pipeline_mode = #tpu.pipeline_mode<synchronous>, transform_indices = @transform_15, window_bounds = array<i64: 1, 16>}]} {
    %c0 = arith.constant 0 : index
    %c0_0 = arith.constant 0 : index
    %0 = vector.load %arg1[%c0, %c0_0] : memref<32x16xf32, #tpu.memory_space<vmem>>, vector<32x16xf32>
    %c0_1 = arith.constant 0 : index
    %c0_2 = arith.constant 0 : index
    %1 = vector.load %arg2[%c0_1, %c0_2] : memref<16x16xf32, #tpu.memory_space<vmem>>, vector<16x16xf32>
    %cst = arith.constant dense<0.000000e+00> : vector<32x16xf32>
    %2 = tpu.matmul %0, %1, %cst {dimension_numbers = #tpu.dot_dimension_numbers<[1], [0], [0], [1], [0, 0, 1, 1], [], []>} : vector<32x16xf32>, vector<16x16xf32>, vector<32x16xf32> -> vector<32x16xf32>
    %c0_3 = arith.constant 0 : index
    %c0_4 = arith.constant 0 : index
    %3 = vector.load %arg3[%c0_3, %c0_4] : memref<32x16xf32, #tpu.memory_space<vmem>>, vector<32x16xf32>
    %4 = arith.addf %2, %3 : vector<32x16xf32>
    %c0_5 = arith.constant 0 : index
    %c0_6 = arith.constant 0 : index
    %5 = vector.load %arg4[%c0_5, %c0_6] : memref<16x48xf32, #tpu.memory_space<vmem>>, vector<16x48xf32>
    %cst_7 = arith.constant dense<0.000000e+00> : vector<32x48xf32>
    %6 = tpu.matmul %4, %5, %cst_7 {dimension_numbers = #tpu.dot_dimension_numbers<[1], [0], [0], [1], [0, 0, 1, 1], [], []>} : vector<32x16xf32>, vector<16x48xf32>, vector<32x48xf32> -> vector<32x48xf32>
    %c0_8 = arith.constant 0 : index
    %c0_9 = arith.constant 0 : index
    %7 = vector.load %arg5[%c0_8, %c0_9] : memref<1x48xf32, #tpu.memory_space<vmem>>, vector<1x48xf32>
    %8 = vector.broadcast %7 : vector<1x48xf32> to vector<32x48xf32>
    %9 = arith.addf %6, %8 : vector<32x48xf32>
    %cst_10 = arith.constant 0.000000e+00 : f32
    %10 = vector.broadcast %cst_10 : f32 to vector<16x16xf32>
    %11 = vector.extract_strided_slice %9 {offsets = [0, 0], sizes = [16, 16], strides = [1, 1]} : vector<32x48xf32> to vector<16x16xf32>
    %12 = vector.extract_strided_slice %9 {offsets = [0, 16], sizes = [16, 16], strides = [1, 1]} : vector<32x48xf32> to vector<16x16xf32>
    %13 = vector.extract_strided_slice %9 {offsets = [0, 32], sizes = [16, 16], strides = [1, 1]} : vector<32x48xf32> to vector<16x16xf32>
    %14 = vector.extract_strided_slice %11 {offsets = [0, 0], sizes = [16, 8], strides = [1, 1]} : vector<16x16xf32> to vector<16x8xf32>
    %15 = vector.extract_strided_slice %12 {offsets = [0, 0], sizes = [16, 8], strides = [1, 1]} : vector<16x16xf32> to vector<16x8xf32>
    %cst_11 = arith.constant dense<0.000000e+00> : vector<16x16xf32>
    %16 = tpu.matmul %14, %15, %cst_11 {dimension_numbers = #tpu.dot_dimension_numbers<[1], [1], [0], [0], [0, 0, 1, 0], [], []>} : vector<16x8xf32>, vector<16x8xf32>, vector<16x16xf32> -> vector<16x16xf32>
    %cst_12 = arith.constant 0.353553385 : f32
    %17 = vector.broadcast %cst_12 : f32 to vector<16x16xf32>
    %18 = arith.mulf %16, %17 : vector<16x16xf32>
    %cst_13 = arith.constant dense<0xFF800000> : vector<16xf32>
    %19 = vector.multi_reduction <maximumf>, %18, %cst_13 [1] : vector<16x16xf32> to vector<16xf32>
    %20 = vector.shape_cast %19 : vector<16xf32> to vector<16x1xf32>
    %21 = vector.broadcast %20 : vector<16x1xf32> to vector<16x16xf32>
    %22 = arith.subf %18, %21 : vector<16x16xf32>
    %23 = math.exp %22 : vector<16x16xf32>
    %cst_14 = arith.constant dense<0.000000e+00> : vector<16xf32>
    %24 = vector.multi_reduction <add>, %23, %cst_14 [1] : vector<16x16xf32> to vector<16xf32>
    %25 = vector.shape_cast %24 : vector<16xf32> to vector<16x1xf32>
    %26 = tpu.reciprocal %25 {approx = true} : vector<16x1xf32> -> vector<16x1xf32>
    %27 = vector.broadcast %26 : vector<16x1xf32> to vector<16x16xf32>
    %28 = arith.mulf %23, %27 : vector<16x16xf32>
    %29 = arith.addf %10, %28 : vector<16x16xf32>
    %30 = vector.extract_strided_slice %11 {offsets = [0, 8], sizes = [16, 8], strides = [1, 1]} : vector<16x16xf32> to vector<16x8xf32>
    %31 = vector.extract_strided_slice %12 {offsets = [0, 8], sizes = [16, 8], strides = [1, 1]} : vector<16x16xf32> to vector<16x8xf32>
    %cst_15 = arith.constant dense<0.000000e+00> : vector<16x16xf32>
    %32 = tpu.matmul %30, %31, %cst_15 {dimension_numbers = #tpu.dot_dimension_numbers<[1], [1], [0], [0], [0, 0, 1, 0], [], []>} : vector<16x8xf32>, vector<16x8xf32>, vector<16x16xf32> -> vector<16x16xf32>
    %cst_16 = arith.constant 0.353553385 : f32
    %33 = vector.broadcast %cst_16 : f32 to vector<16x16xf32>
    %34 = arith.mulf %32, %33 : vector<16x16xf32>
    %cst_17 = arith.constant dense<0xFF800000> : vector<16xf32>
    %35 = vector.multi_reduction <maximumf>, %34, %cst_17 [1] : vector<16x16xf32> to vector<16xf32>
    %36 = vector.shape_cast %35 : vector<16xf32> to vector<16x1xf32>
    %37 = vector.broadcast %36 : vector<16x1xf32> to vector<16x16xf32>
    %38 = arith.subf %34, %37 : vector<16x16xf32>
    %39 = math.exp %38 : vector<16x16xf32>
    %cst_18 = arith.constant dense<0.000000e+00> : vector<16xf32>
    %40 = vector.multi_reduction <add>, %39, %cst_18 [1] : vector<16x16xf32> to vector<16xf32>
    %41 = vector.shape_cast %40 : vector<16xf32> to vector<16x1xf32>
    %42 = tpu.reciprocal %41 {approx = true} : vector<16x1xf32> -> vector<16x1xf32>
    %43 = vector.broadcast %42 : vector<16x1xf32> to vector<16x16xf32>
    %44 = arith.mulf %39, %43 : vector<16x16xf32>
    %45 = arith.addf %29, %44 : vector<16x16xf32>
    %46 = vector.extract_strided_slice %9 {offsets = [16, 0], sizes = [16, 16], strides = [1, 1]} : vector<32x48xf32> to vector<16x16xf32>
    %47 = vector.extract_strided_slice %9 {offsets = [16, 16], sizes = [16, 16], strides = [1, 1]} : vector<32x48xf32> to vector<16x16xf32>
    %48 = vector.extract_strided_slice %9 {offsets = [16, 32], sizes = [16, 16], strides = [1, 1]} : vector<32x48xf32> to vector<16x16xf32>
    %49 = vector.extract_strided_slice %46 {offsets = [0, 0], sizes = [16, 8], strides = [1, 1]} : vector<16x16xf32> to vector<16x8xf32>
    %50 = vector.extract_strided_slice %47 {offsets = [0, 0], sizes = [16, 8], strides = [1, 1]} : vector<16x16xf32> to vector<16x8xf32>
    %cst_19 = arith.constant dense<0.000000e+00> : vector<16x16xf32>
    %51 = tpu.matmul %49, %50, %cst_19 {dimension_numbers = #tpu.dot_dimension_numbers<[1], [1], [0], [0], [0, 0, 1, 0], [], []>} : vector<16x8xf32>, vector<16x8xf32>, vector<16x16xf32> -> vector<16x16xf32>
    %cst_20 = arith.constant 0.353553385 : f32
    %52 = vector.broadcast %cst_20 : f32 to vector<16x16xf32>
    %53 = arith.mulf %51, %52 : vector<16x16xf32>
    %cst_21 = arith.constant dense<0xFF800000> : vector<16xf32>
    %54 = vector.multi_reduction <maximumf>, %53, %cst_21 [1] : vector<16x16xf32> to vector<16xf32>
    %55 = vector.shape_cast %54 : vector<16xf32> to vector<16x1xf32>
    %56 = vector.broadcast %55 : vector<16x1xf32> to vector<16x16xf32>
    %57 = arith.subf %53, %56 : vector<16x16xf32>
    %58 = math.exp %57 : vector<16x16xf32>
    %cst_22 = arith.constant dense<0.000000e+00> : vector<16xf32>
    %59 = vector.multi_reduction <add>, %58, %cst_22 [1] : vector<16x16xf32> to vector<16xf32>
    %60 = vector.shape_cast %59 : vector<16xf32> to vector<16x1xf32>
    %61 = tpu.reciprocal %60 {approx = true} : vector<16x1xf32> -> vector<16x1xf32>
    %62 = vector.broadcast %61 : vector<16x1xf32> to vector<16x16xf32>
    %63 = arith.mulf %58, %62 : vector<16x16xf32>
    %64 = arith.addf %45, %63 : vector<16x16xf32>
    %65 = vector.extract_strided_slice %46 {offsets = [0, 8], sizes = [16, 8], strides = [1, 1]} : vector<16x16xf32> to vector<16x8xf32>
    %66 = vector.extract_strided_slice %47 {offsets = [0, 8], sizes = [16, 8], strides = [1, 1]} : vector<16x16xf32> to vector<16x8xf32>
    %cst_23 = arith.constant dense<0.000000e+00> : vector<16x16xf32>
    %67 = tpu.matmul %65, %66, %cst_23 {dimension_numbers = #tpu.dot_dimension_numbers<[1], [1], [0], [0], [0, 0, 1, 0], [], []>} : vector<16x8xf32>, vector<16x8xf32>, vector<16x16xf32> -> vector<16x16xf32>
    %cst_24 = arith.constant 0.353553385 : f32
    %68 = vector.broadcast %cst_24 : f32 to vector<16x16xf32>
    %69 = arith.mulf %67, %68 : vector<16x16xf32>
    %cst_25 = arith.constant dense<0xFF800000> : vector<16xf32>
    %70 = vector.multi_reduction <maximumf>, %69, %cst_25 [1] : vector<16x16xf32> to vector<16xf32>
    %71 = vector.shape_cast %70 : vector<16xf32> to vector<16x1xf32>
    %72 = vector.broadcast %71 : vector<16x1xf32> to vector<16x16xf32>
    %73 = arith.subf %69, %72 : vector<16x16xf32>
    %74 = math.exp %73 : vector<16x16xf32>
    %cst_26 = arith.constant dense<0.000000e+00> : vector<16xf32>
    %75 = vector.multi_reduction <add>, %74, %cst_26 [1] : vector<16x16xf32> to vector<16xf32>
    %76 = vector.shape_cast %75 : vector<16xf32> to vector<16x1xf32>
    %77 = tpu.reciprocal %76 {approx = true} : vector<16x1xf32> -> vector<16x1xf32>
    %78 = vector.broadcast %77 : vector<16x1xf32> to vector<16x16xf32>
    %79 = arith.mulf %74, %78 : vector<16x16xf32>
    %80 = arith.addf %64, %79 : vector<16x16xf32>
    %cst_27 = arith.constant 2.500000e-01 : f32
    %81 = vector.broadcast %cst_27 : f32 to vector<16x16xf32>
    %82 = arith.mulf %80, %81 : vector<16x16xf32>
    %c0_28 = arith.constant 0 : index
    %c0_29 = arith.constant 0 : index
    %83 = vector.load %arg15[%c0_28, %c0_29] : memref<16x16xf32, #tpu.memory_space<vmem>>, vector<16x16xf32>
    tpu.vector_store %arg15[%c0_28, %c0_29], %82 {strides = array<i32>} : memref<16x16xf32, #tpu.memory_space<vmem>>, vector<16x16xf32>,
    %cst_30 = arith.constant dense<0.000000e+00> : vector<16xf32>
    %84 = vector.multi_reduction <add>, %82, %cst_30 [1] : vector<16x16xf32> to vector<16xf32>
    %85 = vector.shape_cast %84 : vector<16xf32> to vector<16x1xf32>
    %cst_31 = arith.constant 0.000000e+00 : f32
    %86 = vector.broadcast %cst_31 : f32 to vector<16x1xf32>
    %87 = arith.cmpf oeq, %85, %86 : vector<16x1xf32>
    %cst_32 = arith.constant 1.000000e+00 : f32
    %88 = vector.broadcast %cst_32 : f32 to vector<16x1xf32>
    %89 = arith.select %87, %88, %85 : vector<16x1xi1>, vector<16x1xf32>
    %90 = vector.broadcast %89 : vector<16x1xf32> to vector<16x16xf32>
    %91 = arith.divf %82, %90 : vector<16x16xf32>
    %cst_33 = arith.constant 6.250000e-02 : f32
    %92 = vector.broadcast %cst_33 : f32 to vector<1x16xf32>
    %c0_i32 = arith.constant 0 : i32
    %c100_i32 = arith.constant 100 : i32
    %93 = arith.addi %c0_i32, %c100_i32 : i32
    %c1_i32 = arith.constant 1 : i32
    %94 = scf.for %arg17 = %c0_i32 to %93 step %c1_i32 iter_args(%arg18 = %92) -> (vector<1x16xf32>)  : i32 {
      %cst_78 = arith.constant dense<0.000000e+00> : vector<1x16xf32>
      %209 = tpu.matmul %arg18, %91, %cst_78 {dimension_numbers = #tpu.dot_dimension_numbers<[1], [0], [0], [1], [0, 0, 1, 1], [], []>} : vector<1x16xf32>, vector<16x16xf32>, vector<1x16xf32> -> vector<1x16xf32>
      %cst_79 = arith.constant 8.500000e-01 : f32
      %210 = vector.broadcast %cst_79 : f32 to vector<1x16xf32>
      %211 = arith.mulf %210, %209 : vector<1x16xf32>
      %cst_80 = arith.constant 9.375000e-03 : f32
      %212 = vector.broadcast %cst_80 : f32 to vector<1x16xf32>
      %213 = arith.addf %211, %212 : vector<1x16xf32>
      scf.yield %213 : vector<1x16xf32>
    }
    %95 = vector.shape_cast %94 : vector<1x16xf32> to vector<1x16xf32>
    %96 = vector.broadcast %95 : vector<1x16xf32> to vector<16x16xf32>
    %97 = tpu.transpose %96, [1, 0] : vector<16x16xf32> -> vector<16x16xf32>
    %98 = arith.cmpf olt, %97, %96 : vector<16x16xf32>
    %99 = arith.extui %98 : vector<16x16xi1> to vector<16x16xi32>
    %100 = arith.sitofp %99 : vector<16x16xi32> to vector<16x16xf32>
    %cst_34 = arith.constant dense<0.000000e+00> : vector<16xf32>
    %101 = vector.multi_reduction <add>, %100, %cst_34 [0] : vector<16x16xf32> to vector<16xf32>
    %102 = vector.shape_cast %101 : vector<16xf32> to vector<1x16xf32>
    %cst_35 = arith.constant 7.000000e+00 : f32
    %103 = vector.broadcast %cst_35 : f32 to vector<1x16xf32>
    %104 = arith.cmpf ole, %102, %103 : vector<1x16xf32>
    %cst_36 = arith.constant 0xFF800000 : f32
    %105 = vector.broadcast %cst_36 : f32 to vector<1x16xf32>
    %106 = arith.select %104, %94, %105 : vector<1x16xi1>, vector<1x16xf32>
    %107 = vector.shape_cast %106 : vector<1x16xf32> to vector<1x1x16xf32>
    %cst_37 = arith.constant dense<0xFF800000> : vector<1xf32>
    %108 = vector.multi_reduction <maximumf>, %107, %cst_37 [1, 2] : vector<1x1x16xf32> to vector<1xf32>
    %109 = vector.shape_cast %108 : vector<1xf32> to vector<1x1x1xf32>
    %110 = vector.extract %109[0, 0, 0] : f32 from vector<1x1x1xf32>
    %111 = vector.broadcast %110 : f32 to vector<1x16xf32>
    %112 = arith.cmpf ole, %94, %111 : vector<1x16xf32>
    %113 = arith.extui %112 : vector<1x16xi1> to vector<1x16xi32>
    %114 = arith.sitofp %113 : vector<1x16xi32> to vector<1x16xf32>
    %cst_38 = arith.constant 1.000000e+00 : f32
    %115 = vector.broadcast %cst_38 : f32 to vector<1x16xf32>
    %116 = arith.subf %115, %114 : vector<1x16xf32>
    %c0_39 = arith.constant 0 : index
    %c0_40 = arith.constant 0 : index
    %117 = vector.load %arg16[%c0_39, %c0_40] : memref<1x16xf32, #tpu.memory_space<vmem>>, vector<1x16xf32>
    tpu.vector_store %arg16[%c0_39, %c0_40], %114 {strides = array<i32>} : memref<1x16xf32, #tpu.memory_space<vmem>>, vector<1x16xf32>,
    %118 = vector.broadcast %116 : vector<1x16xf32> to vector<16x16xf32>
    %119 = arith.mulf %28, %118 : vector<16x16xf32>
    %120 = vector.extract_strided_slice %13 {offsets = [0, 0], sizes = [16, 8], strides = [1, 1]} : vector<16x16xf32> to vector<16x8xf32>
    %cst_41 = arith.constant dense<0.000000e+00> : vector<16x8xf32>
    %121 = tpu.matmul %119, %120, %cst_41 {dimension_numbers = #tpu.dot_dimension_numbers<[1], [0], [0], [1], [0, 0, 1, 1], [], []>} : vector<16x16xf32>, vector<16x8xf32>, vector<16x8xf32> -> vector<16x8xf32>
    %122 = vector.broadcast %116 : vector<1x16xf32> to vector<16x16xf32>
    %123 = arith.mulf %44, %122 : vector<16x16xf32>
    %124 = vector.extract_strided_slice %13 {offsets = [0, 8], sizes = [16, 8], strides = [1, 1]} : vector<16x16xf32> to vector<16x8xf32>
    %cst_42 = arith.constant dense<0.000000e+00> : vector<16x8xf32>
    %125 = tpu.matmul %123, %124, %cst_42 {dimension_numbers = #tpu.dot_dimension_numbers<[1], [0], [0], [1], [0, 0, 1, 1], [], []>} : vector<16x16xf32>, vector<16x8xf32>, vector<16x8xf32> -> vector<16x8xf32>
    %126 = tpu.concatenate %121, %125 in 1 : vector<16x8xf32>, vector<16x8xf32> -> vector<16x16xf32>
    %127 = vector.extract_strided_slice %4 {offsets = [0, 0], sizes = [16, 16], strides = [1, 1]} : vector<32x16xf32> to vector<16x16xf32>
    %128 = arith.addf %127, %126 : vector<16x16xf32>
    %129 = vector.broadcast %116 : vector<1x16xf32> to vector<16x16xf32>
    %130 = arith.mulf %63, %129 : vector<16x16xf32>
    %131 = vector.extract_strided_slice %48 {offsets = [0, 0], sizes = [16, 8], strides = [1, 1]} : vector<16x16xf32> to vector<16x8xf32>
    %cst_43 = arith.constant dense<0.000000e+00> : vector<16x8xf32>
    %132 = tpu.matmul %130, %131, %cst_43 {dimension_numbers = #tpu.dot_dimension_numbers<[1], [0], [0], [1], [0, 0, 1, 1], [], []>} : vector<16x16xf32>, vector<16x8xf32>, vector<16x8xf32> -> vector<16x8xf32>
    %133 = vector.broadcast %116 : vector<1x16xf32> to vector<16x16xf32>
    %134 = arith.mulf %79, %133 : vector<16x16xf32>
    %135 = vector.extract_strided_slice %48 {offsets = [0, 8], sizes = [16, 8], strides = [1, 1]} : vector<16x16xf32> to vector<16x8xf32>
    %cst_44 = arith.constant dense<0.000000e+00> : vector<16x8xf32>
    %136 = tpu.matmul %134, %135, %cst_44 {dimension_numbers = #tpu.dot_dimension_numbers<[1], [0], [0], [1], [0, 0, 1, 1], [], []>} : vector<16x16xf32>, vector<16x8xf32>, vector<16x8xf32> -> vector<16x8xf32>
    %137 = tpu.concatenate %132, %136 in 1 : vector<16x8xf32>, vector<16x8xf32> -> vector<16x16xf32>
    %138 = vector.extract_strided_slice %4 {offsets = [16, 0], sizes = [16, 16], strides = [1, 1]} : vector<32x16xf32> to vector<16x16xf32>
    %139 = arith.addf %138, %137 : vector<16x16xf32>
    %140 = tpu.concatenate %128, %139 in 0 : vector<16x16xf32>, vector<16x16xf32> -> vector<32x16xf32>
    %c0_45 = arith.constant 0 : index
    %c0_46 = arith.constant 0 : index
    %141 = vector.load %arg10[%c0_45, %c0_46] : memref<1x16xf32, #tpu.memory_space<vmem>>, vector<1x16xf32>
    %c0_47 = arith.constant 0 : index
    %c0_48 = arith.constant 0 : index
    %142 = vector.load %arg11[%c0_47, %c0_48] : memref<1x16xf32, #tpu.memory_space<vmem>>, vector<1x16xf32>
    %cst_49 = arith.constant dense<0.000000e+00> : vector<32xf32>
    %143 = vector.multi_reduction <add>, %140, %cst_49 [1] : vector<32x16xf32> to vector<32xf32>
    %144 = vector.shape_cast %143 : vector<32xf32> to vector<32x1xf32>
    %cst_50 = arith.constant 1.600000e+01 : f32
    %145 = vector.broadcast %cst_50 : f32 to vector<32x1xf32>
    %146 = arith.divf %144, %145 : vector<32x1xf32>
    %147 = vector.broadcast %146 : vector<32x1xf32> to vector<32x16xf32>
    %148 = arith.subf %140, %147 : vector<32x16xf32>
    %149 = arith.mulf %148, %148 : vector<32x16xf32>
    %cst_51 = arith.constant dense<0.000000e+00> : vector<32xf32>
    %150 = vector.multi_reduction <add>, %149, %cst_51 [1] : vector<32x16xf32> to vector<32xf32>
    %151 = vector.shape_cast %150 : vector<32xf32> to vector<32x1xf32>
    %cst_52 = arith.constant 1.600000e+01 : f32
    %152 = vector.broadcast %cst_52 : f32 to vector<32x1xf32>
    %153 = arith.divf %151, %152 : vector<32x1xf32>
    %154 = vector.broadcast %146 : vector<32x1xf32> to vector<32x16xf32>
    %155 = arith.subf %140, %154 : vector<32x16xf32>
    %cst_53 = arith.constant 9.99999974E-6 : f32
    %156 = vector.broadcast %cst_53 : f32 to vector<32x1xf32>
    %157 = arith.addf %153, %156 : vector<32x1xf32>
    %158 = math.rsqrt %157 : vector<32x1xf32>
    %159 = vector.broadcast %158 : vector<32x1xf32> to vector<32x16xf32>
    %160 = arith.mulf %155, %159 : vector<32x16xf32>
    %161 = vector.broadcast %141 : vector<1x16xf32> to vector<32x16xf32>
    %162 = arith.mulf %160, %161 : vector<32x16xf32>
    %163 = vector.broadcast %142 : vector<1x16xf32> to vector<32x16xf32>
    %164 = arith.addf %162, %163 : vector<32x16xf32>
    %c0_54 = arith.constant 0 : index
    %c0_55 = arith.constant 0 : index
    %165 = vector.load %arg6[%c0_54, %c0_55] : memref<16x16xf32, #tpu.memory_space<vmem>>, vector<16x16xf32>
    %cst_56 = arith.constant dense<0.000000e+00> : vector<32x16xf32>
    %166 = tpu.matmul %164, %165, %cst_56 {dimension_numbers = #tpu.dot_dimension_numbers<[1], [0], [0], [1], [0, 0, 1, 1], [], []>} : vector<32x16xf32>, vector<16x16xf32>, vector<32x16xf32> -> vector<32x16xf32>
    %c0_57 = arith.constant 0 : index
    %c0_58 = arith.constant 0 : index
    %167 = vector.load %arg7[%c0_57, %c0_58] : memref<1x16xf32, #tpu.memory_space<vmem>>, vector<1x16xf32>
    %168 = vector.broadcast %167 : vector<1x16xf32> to vector<32x16xf32>
    %169 = arith.addf %166, %168 : vector<32x16xf32>
    %cst_59 = arith.constant 0.000000e+00 : f32
    %170 = vector.broadcast %cst_59 : f32 to vector<32x16xf32>
    %171 = arith.maximumf %169, %170 : vector<32x16xf32>
    %c0_60 = arith.constant 0 : index
    %c0_61 = arith.constant 0 : index
    %172 = vector.load %arg8[%c0_60, %c0_61] : memref<16x16xf32, #tpu.memory_space<vmem>>, vector<16x16xf32>
    %cst_62 = arith.constant dense<0.000000e+00> : vector<32x16xf32>
    %173 = tpu.matmul %171, %172, %cst_62 {dimension_numbers = #tpu.dot_dimension_numbers<[1], [0], [0], [1], [0, 0, 1, 1], [], []>} : vector<32x16xf32>, vector<16x16xf32>, vector<32x16xf32> -> vector<32x16xf32>
    %c0_63 = arith.constant 0 : index
    %c0_64 = arith.constant 0 : index
    %174 = vector.load %arg9[%c0_63, %c0_64] : memref<1x16xf32, #tpu.memory_space<vmem>>, vector<1x16xf32>
    %175 = vector.broadcast %174 : vector<1x16xf32> to vector<32x16xf32>
    %176 = arith.addf %173, %175 : vector<32x16xf32>
    %177 = arith.addf %164, %176 : vector<32x16xf32>
    %c0_65 = arith.constant 0 : index
    %c0_66 = arith.constant 0 : index
    %178 = vector.load %arg12[%c0_65, %c0_66] : memref<1x16xf32, #tpu.memory_space<vmem>>, vector<1x16xf32>
    %c0_67 = arith.constant 0 : index
    %c0_68 = arith.constant 0 : index
    %179 = vector.load %arg13[%c0_67, %c0_68] : memref<1x16xf32, #tpu.memory_space<vmem>>, vector<1x16xf32>
    %cst_69 = arith.constant dense<0.000000e+00> : vector<32xf32>
    %180 = vector.multi_reduction <add>, %177, %cst_69 [1] : vector<32x16xf32> to vector<32xf32>
    %181 = vector.shape_cast %180 : vector<32xf32> to vector<32x1xf32>
    %cst_70 = arith.constant 1.600000e+01 : f32
    %182 = vector.broadcast %cst_70 : f32 to vector<32x1xf32>
    %183 = arith.divf %181, %182 : vector<32x1xf32>
    %184 = vector.broadcast %183 : vector<32x1xf32> to vector<32x16xf32>
    %185 = arith.subf %177, %184 : vector<32x16xf32>
    %186 = arith.mulf %185, %185 : vector<32x16xf32>
    %cst_71 = arith.constant dense<0.000000e+00> : vector<32xf32>
    %187 = vector.multi_reduction <add>, %186, %cst_71 [1] : vector<32x16xf32> to vector<32xf32>
    %188 = vector.shape_cast %187 : vector<32xf32> to vector<32x1xf32>
    %cst_72 = arith.constant 1.600000e+01 : f32
    %189 = vector.broadcast %cst_72 : f32 to vector<32x1xf32>
    %190 = arith.divf %188, %189 : vector<32x1xf32>
    %191 = vector.broadcast %183 : vector<32x1xf32> to vector<32x16xf32>
    %192 = arith.subf %177, %191 : vector<32x16xf32>
    %cst_73 = arith.constant 9.99999974E-6 : f32
    %193 = vector.broadcast %cst_73 : f32 to vector<32x1xf32>
    %194 = arith.addf %190, %193 : vector<32x1xf32>
    %195 = math.rsqrt %194 : vector<32x1xf32>
    %196 = vector.broadcast %195 : vector<32x1xf32> to vector<32x16xf32>
    %197 = arith.mulf %192, %196 : vector<32x16xf32>
    %198 = vector.broadcast %178 : vector<1x16xf32> to vector<32x16xf32>
    %199 = arith.mulf %197, %198 : vector<32x16xf32>
    %200 = vector.broadcast %179 : vector<1x16xf32> to vector<32x16xf32>
    %201 = arith.addf %199, %200 : vector<32x16xf32>
    %202 = arith.mulf %94, %116 : vector<1x16xf32>
    %203 = vector.extract_strided_slice %201 {offsets = [0, 0], sizes = [16, 16], strides = [1, 1]} : vector<32x16xf32> to vector<16x16xf32>
    %cst_74 = arith.constant dense<0.000000e+00> : vector<1x16xf32>
    %204 = tpu.matmul %202, %203, %cst_74 {dimension_numbers = #tpu.dot_dimension_numbers<[1], [0], [0], [1], [0, 0, 1, 1], [], []>} : vector<1x16xf32>, vector<16x16xf32>, vector<1x16xf32> -> vector<1x16xf32>
    %205 = vector.extract_strided_slice %201 {offsets = [16, 0], sizes = [16, 16], strides = [1, 1]} : vector<32x16xf32> to vector<16x16xf32>
    %cst_75 = arith.constant dense<0.000000e+00> : vector<1x16xf32>
    %206 = tpu.matmul %202, %205, %cst_75 {dimension_numbers = #tpu.dot_dimension_numbers<[1], [0], [0], [1], [0, 0, 1, 1], [], []>} : vector<1x16xf32>, vector<16x16xf32>, vector<1x16xf32> -> vector<1x16xf32>
    %207 = tpu.concatenate %204, %206 in 0 : vector<1x16xf32>, vector<1x16xf32> -> vector<2x16xf32>
    %c0_76 = arith.constant 0 : index
    %c0_77 = arith.constant 0 : index
    %208 = vector.load %arg14[%c0_76, %c0_77] : memref<2x16xf32, #tpu.memory_space<vmem>>, vector<2x16xf32>
    tpu.vector_store %arg14[%c0_76, %c0_77], %207 {strides = array<i32>} : memref<2x16xf32, #tpu.memory_space<vmem>>, vector<2x16xf32>,
    return
  }
  func.func @transform_0(%arg0: i32) -> (i32, i32) {
    %c0_i32 = arith.constant 0 : i32
    %c0_i32_0 = arith.constant 0 : i32
    %c0_i32_1 = arith.constant 0 : i32
    return %c0_i32, %c0_i32_0 : i32, i32
  }
  func.func @transform_1(%arg0: i32) -> (i32, i32) {
    %c0_i32 = arith.constant 0 : i32
    %c0_i32_0 = arith.constant 0 : i32
    %c0_i32_1 = arith.constant 0 : i32
    return %c0_i32, %c0_i32_0 : i32, i32
  }
  func.func @transform_2(%arg0: i32) -> (i32, i32) {
    %c0_i32 = arith.constant 0 : i32
    %c0_i32_0 = arith.constant 0 : i32
    %c0_i32_1 = arith.constant 0 : i32
    return %c0_i32, %c0_i32_0 : i32, i32
  }
  func.func @transform_3(%arg0: i32) -> (i32, i32) {
    %c0_i32 = arith.constant 0 : i32
    %c0_i32_0 = arith.constant 0 : i32
    %c0_i32_1 = arith.constant 0 : i32
    return %c0_i32, %c0_i32_0 : i32, i32
  }
  func.func @transform_4(%arg0: i32) -> (i32, i32) {
    %c0_i32 = arith.constant 0 : i32
    %c0_i32_0 = arith.constant 0 : i32
    %c0_i32_1 = arith.constant 0 : i32
    return %c0_i32, %c0_i32_0 : i32, i32
  }
  func.func @transform_5(%arg0: i32) -> (i32, i32) {
    %c0_i32 = arith.constant 0 : i32
    %c0_i32_0 = arith.constant 0 : i32
    %c0_i32_1 = arith.constant 0 : i32
    return %c0_i32, %c0_i32_0 : i32, i32
  }
  func.func @transform_6(%arg0: i32) -> (i32, i32) {
    %c0_i32 = arith.constant 0 : i32
    %c0_i32_0 = arith.constant 0 : i32
    %c0_i32_1 = arith.constant 0 : i32
    return %c0_i32, %c0_i32_0 : i32, i32
  }
  func.func @transform_7(%arg0: i32) -> (i32, i32) {
    %c0_i32 = arith.constant 0 : i32
    %c0_i32_0 = arith.constant 0 : i32
    %c0_i32_1 = arith.constant 0 : i32
    return %c0_i32, %c0_i32_0 : i32, i32
  }
  func.func @transform_8(%arg0: i32) -> (i32, i32) {
    %c0_i32 = arith.constant 0 : i32
    %c0_i32_0 = arith.constant 0 : i32
    %c0_i32_1 = arith.constant 0 : i32
    return %c0_i32, %c0_i32_0 : i32, i32
  }
  func.func @transform_9(%arg0: i32) -> (i32, i32) {
    %c0_i32 = arith.constant 0 : i32
    %c0_i32_0 = arith.constant 0 : i32
    %c0_i32_1 = arith.constant 0 : i32
    return %c0_i32, %c0_i32_0 : i32, i32
  }
  func.func @transform_10(%arg0: i32) -> (i32, i32) {
    %c0_i32 = arith.constant 0 : i32
    %c0_i32_0 = arith.constant 0 : i32
    %c0_i32_1 = arith.constant 0 : i32
    return %c0_i32, %c0_i32_0 : i32, i32
  }
  func.func @transform_11(%arg0: i32) -> (i32, i32) {
    %c0_i32 = arith.constant 0 : i32
    %c0_i32_0 = arith.constant 0 : i32
    %c0_i32_1 = arith.constant 0 : i32
    return %c0_i32, %c0_i32_0 : i32, i32
  }
  func.func @transform_12(%arg0: i32) -> (i32, i32) {
    %c0_i32 = arith.constant 0 : i32
    %c0_i32_0 = arith.constant 0 : i32
    %c0_i32_1 = arith.constant 0 : i32
    return %c0_i32, %c0_i32_0 : i32, i32
  }
  func.func @transform_13(%arg0: i32) -> (i32, i32) {
    %c0_i32 = arith.constant 0 : i32
    %c0_i32_0 = arith.constant 0 : i32
    %c0_i32_1 = arith.constant 0 : i32
    return %c0_i32, %c0_i32_0 : i32, i32
  }
  func.func @transform_14(%arg0: i32) -> (i32, i32) {
    %c0_i32 = arith.constant 0 : i32
    %c0_i32_0 = arith.constant 0 : i32
    %c0_i32_1 = arith.constant 0 : i32
    return %c0_i32, %c0_i32_0 : i32, i32
  }
  func.func @transform_15(%arg0: i32) -> (i32, i32) {
    %c0_i32 = arith.constant 0 : i32
    %c0_i32_0 = arith.constant 0 : i32
    %c0_i32_1 = arith.constant 0 : i32
    return %c0_i32, %c0_i32_0 : i32, i32
  }
}

</mosaic_0001>

<llo_original>
// kernel: sapl_forward.1
$region0: #{sapl_forward.1}
  #allocation0 [shape = 'u32[]', space=smem, size = 0x4, offset = 0x4, fixed_abs, tag = 'smem constant byte address 0x4 - core index']
  #allocation1 [shape = 'u32[144,128]{1,0:T(1,128)}', space=vmem, size = 0x12000, scoped, tag = 'internal scratch']
  %s0 = inlined_call_operand.vmem [shape: f32[32,16], index: 0, kind: input, shape index: {}]
  %s1 = inlined_call_operand.vmem [shape: f32[16,16], index: 1, kind: input, shape index: {}]
  %s2 = inlined_call_operand.vmem [shape: f32[32,16], index: 2, kind: input, shape index: {}]
  %s3 = inlined_call_operand.vmem [shape: f32[16,48], index: 3, kind: input, shape index: {}]
  %s4 = inlined_call_operand.vmem [shape: f32[1,48], index: 4, kind: input, shape index: {}]
  %s5 = inlined_call_operand.vmem [shape: f32[16,16], index: 5, kind: input, shape index: {}]
  %s6 = inlined_call_operand.vmem [shape: f32[1,16], index: 6, kind: input, shape index: {}]
  %s7 = inlined_call_operand.vmem [shape: f32[16,16], index: 7, kind: input, shape index: {}]
  %s8 = inlined_call_operand.vmem [shape: f32[1,16], index: 8, kind: input, shape index: {}]
  %s9 = inlined_call_operand.vmem [shape: f32[1,16], index: 9, kind: input, shape index: {}]
  %s10 = inlined_call_operand.vmem [shape: f32[1,16], index: 10, kind: input, shape index: {}]
  %s11 = inlined_call_operand.vmem [shape: f32[1,16], index: 11, kind: input, shape index: {}]
  %s12 = inlined_call_operand.vmem [shape: f32[1,16], index: 12, kind: input, shape index: {}]
  %s13 = inlined_call_operand.hbm [shape: f32[2,16], index: 13, kind: output, shape index: {0}]
  %s14 = inlined_call_operand.hbm [shape: f32[16,16], index: 14, kind: output, shape index: {1}]
  %s15 = inlined_call_operand.vmem [shape: f32[1,16], index: 15, kind: output, shape index: {2}]
  %16 = xla_tuple %s13, %s14, %s15
  %s17 = sld [smem:[#allocation0]]
  $region85: #{sapl_forward.1} parent=0
    _
  %s19 = ssub.s32 1, %s17
  %s20 = scalar_select 0, %s19, %s17
  $region1: #{sapl_forward.1} parent=0
    #allocation2 [shape = 'u8[1024]{0}', space=vmem, size = 0x400, scoped, tag = 'output window, operand 0, single buffered']
    #allocation3 [shape = 's32[1]{0}', space=sflag, size = 0x4, scoped, tag = 'scoped memory for sapl_forward.1']
    #allocation4 [shape = 'u8[8192]{0}', space=vmem, size = 0x2000, scoped, tag = 'output window, operand 1, single buffered']
    #allocation5 [shape = 's32[1]{0}', space=sflag, size = 0x4, scoped, tag = 'scoped memory for sapl_forward.1']
    %21 = vsyncpa [#allocation3], 0
    %22 = vsyncpa [#allocation5], 0
    // Predicated region
    $region2: #{sapl_forward.1} parent=1 // pred_check
      _
    $region3: #{sapl_forward.1} parent=1 // pred_check_branch
      %24 = sbr.rel (0) target = $region5
    $region4: #{sapl_forward.1} parent=1 // pred_region
      _
    $region5: #{sapl_forward.1} parent=1 // pred_fallthru
      _
    // Predicated region
    $region6: #{sapl_forward.1} parent=1 // pred_check
      _
    $region7: #{sapl_forward.1} parent=1 // pred_check_branch
      %26 = sbr.rel (0) target = $region9
    $region8: #{sapl_forward.1} parent=1 // pred_region
      _
    $region9: #{sapl_forward.1} parent=1 // pred_fallthru
      _
    // Predicated region
    $region10: #{sapl_forward.1} parent=1 // pred_check
      _
    $region11: #{sapl_forward.1} parent=1 // pred_check_branch
      %28 = sbr.rel (0) target = $region13
    $region12: #{sapl_forward.1} parent=1 // pred_region
      _
    $region13: #{sapl_forward.1} parent=1 // pred_fallthru
      _
    // Predicated region
    $region14: #{sapl_forward.1} parent=1 // pred_check
      _
    $region15: #{sapl_forward.1} parent=1 // pred_check_branch
      %30 = sbr.rel (0) target = $region17
    $region16: #{sapl_forward.1} parent=1 // pred_region
      _
    $region17: #{sapl_forward.1} parent=1 // pred_fallthru
      _
    // Predicated region
    $region18: #{sapl_forward.1} parent=1 // pred_check
      _
    $region19: #{sapl_forward.1} parent=1 // pred_check_branch
      %32 = sbr.rel (0) target = $region21
    $region20: #{sapl_forward.1} parent=1 // pred_region
      _
    $region21: #{sapl_forward.1} parent=1 // pred_fallthru
      _
    // Predicated region
    $region22: #{sapl_forward.1} parent=1 // pred_check
      _
    $region23: #{sapl_forward.1} parent=1 // pred_check_branch
      %34 = sbr.rel (0) target = $region25
    $region24: #{sapl_forward.1} parent=1 // pred_region
      _
    $region25: #{sapl_forward.1} parent=1 // pred_fallthru
      _
    // Predicated region
    $region26: #{sapl_forward.1} parent=1 // pred_check
      _
    $region27: #{sapl_forward.1} parent=1 // pred_check_branch
      %36 = sbr.rel (0) target = $region29
    $region28: #{sapl_forward.1} parent=1 // pred_region
      _
    $region29: #{sapl_forward.1} parent=1 // pred_fallthru
      _
    // Predicated region
    $region30: #{sapl_forward.1} parent=1 // pred_check
      _
    $region31: #{sapl_forward.1} parent=1 // pred_check_branch
      %38 = sbr.rel (0) target = $region33
    $region32: #{sapl_forward.1} parent=1 // pred_region
      _
    $region33: #{sapl_forward.1} parent=1 // pred_fallthru
      _
    // Predicated region
    $region34: #{sapl_forward.1} parent=1 // pred_check
      _
    $region35: #{sapl_forward.1} parent=1 // pred_check_branch
      %40 = sbr.rel (0) target = $region37
    $region36: #{sapl_forward.1} parent=1 // pred_region
      _
    $region37: #{sapl_forward.1} parent=1 // pred_fallthru
      _
    // Predicated region
    $region38: #{sapl_forward.1} parent=1 // pred_check
      _
    $region39: #{sapl_forward.1} parent=1 // pred_check_branch
      %42 = sbr.rel (0) target = $region41
    $region40: #{sapl_forward.1} parent=1 // pred_region
      _
    $region41: #{sapl_forward.1} parent=1 // pred_fallthru
      _
    // Predicated region
    $region42: #{sapl_forward.1} parent=1 // pred_check
      _
    $region43: #{sapl_forward.1} parent=1 // pred_check_branch
      %44 = sbr.rel (0) target = $region45
    $region44: #{sapl_forward.1} parent=1 // pred_region
      _
    $region45: #{sapl_forward.1} parent=1 // pred_fallthru
      _
    // Predicated region
    $region46: #{sapl_forward.1} parent=1 // pred_check
      _
    $region47: #{sapl_forward.1} parent=1 // pred_check_branch
      %46 = sbr.rel (0) target = $region49
    $region48: #{sapl_forward.1} parent=1 // pred_region
      _
    $region49: #{sapl_forward.1} parent=1 // pred_fallthru
      _
    // Predicated region
    $region50: #{sapl_forward.1} parent=1 // pred_check
      _
    $region51: #{sapl_forward.1} parent=1 // pred_check_branch
      %48 = sbr.rel (0) target = $region53
    $region52: #{sapl_forward.1} parent=1 // pred_region
      _
    $region53: #{sapl_forward.1} parent=1 // pred_fallthru
      _
    %v49 = vld [vmem:[%s0] sm:$0xff]
    %v50 = vld [vmem:[%s0 + $0x8] sm:$0xff]
    %v51 = vld [vmem:[%s0 + $0x10] sm:$0xff]
    %v52 = vld [vmem:[%s0 + $0x18] sm:$0xff]
    %v53 = vld [vmem:[%s1] sm:$0xff]
    %v54 = vld [vmem:[%s1 + $0x8] sm:$0xff]
    %v55 = vld [vmem:[%s2] sm:$0xff]
    %v56 = vld [vmem:[%s2 + $0x8] sm:$0xff]
    %v57 = vld [vmem:[%s2 + $0x10] sm:$0xff]
    %v58 = vld [vmem:[%s2 + $0x18] sm:$0xff]
    %vm59 = vcmask 130048
    %v61 = vsel %vm59, %v49, 0
    %v64 = vsel %vm59, %v50, 0
    %v67 = vsel %vm59, %v51, 0
    %v70 = vsel %vm59, %v52, 0
    %72 = vmatprep.subr.mxu0 0.0
    %73 = vmatpush1.msra.mxu0 %v53
    %74 = vmatprep.subr.mxu0 0.0
    %75 = vmatpush1.msra.mxu0 %v54
    %76 = vmatprep.subr.mxu0 0.0
    %77 = vmatpush1.msra.mxu0 0.0
    %78 = vmatprep.subr.mxu0 0.0
    %79 = vmatpush1.msra.mxu0 0.0
    %80 = vmatprep.subr.mxu0 0.0
    %81 = vmatpush1.msra.mxu0 0.0
    %82 = vmatprep.subr.mxu0 0.0
    %83 = vmatpush1.msra.mxu0 0.0
    %84 = vmatprep.subr.mxu0 0.0
    %85 = vmatpush1.msra.mxu0 0.0
    %86 = vmatprep.subr.mxu0 0.0
    %87 = vmatpush1.msra.mxu0 0.0
    %88 = vmatprep.subr.mxu0 0.0
    %89 = vmatpush1.msra.mxu0 0.0
    %90 = vmatprep.subr.mxu0 0.0
    %91 = vmatpush1.msra.mxu0 0.0
    %92 = vmatprep.subr.mxu0 0.0
    %93 = vmatpush1.msra.mxu0 0.0
    %94 = vmatprep.subr.mxu0 0.0
    %95 = vmatpush1.msra.mxu0 0.0
    %96 = vmatprep.subr.mxu0 0.0
    %97 = vmatpush1.msra.mxu0 0.0
    %98 = vmatprep.subr.mxu0 0.0
    %99 = vmatpush1.msra.mxu0 0.0
    %100 = vmatprep.subr.mxu0 0.0
    %101 = vmatpush1.msra.mxu0 0.0
    %102 = vmatprep.subr.mxu0 0.0
    %103 = vmatpush1.msra.mxu0 0.0
    %104 = vmatprep.subr.mxu0 0.0
    %105 = vmatpush1.msra.mxu0 0.0
    %106 = vmatprep.subr.mxu0 0.0
    %107 = vmatpush1.msra.mxu0 0.0
    %108 = vmatprep.subr.mxu0 0.0
    %109 = vmatpush1.msra.mxu0 0.0
    %110 = vmatprep.subr.mxu0 0.0
    %111 = vmatpush1.msra.mxu0 0.0
    %112 = vmatprep.subr.mxu0 0.0
    %113 = vmatpush1.msra.mxu0 0.0
    %114 = vmatprep.subr.mxu0 0.0
    %115 = vmatpush1.msra.mxu0 0.0
    %116 = vmatprep.subr.mxu0 0.0
    %117 = vmatpush1.msra.mxu0 0.0
    %118 = vmatprep.subr.mxu0 0.0
    %119 = vmatpush1.msra.mxu0 0.0
    %120 = vmatprep.subr.mxu0 0.0
    %121 = vmatpush1.msra.mxu0 0.0
    %122 = vmatprep.subr.mxu0 0.0
    %123 = vmatpush1.msra.mxu0 0.0
    %124 = vmatprep.subr.mxu0 0.0
    %125 = vmatpush1.msra.mxu0 0.0
    %126 = vmatprep.subr.mxu0 0.0
    %127 = vmatpush1.msra.mxu0 0.0
    %128 = vmatprep.subr.mxu0 0.0
    %129 = vmatpush1.msra.mxu0 0.0
    %130 = vmatprep.subr.mxu0 0.0
    %131 = vmatpush1.msra.mxu0 0.0
    %132 = vmatprep.subr.mxu0 0.0
    %133 = vmatpush1.msra.mxu0 0.0
    %134 = vmatprep.subr.mxu0 0.0
    %135 = vmatpush1.msra.mxu0 0.0
    %136 = vmatprep.mubr.f32.mxu0 0.0
    %137 = vmatmul.mubr.f32.gmra.mrb[0].mxu0 %v61
    %v138 = vpop.f32.mrb[0].mxu0
    %v139 = vadd.f32 %v55, %v138
    %v140 = vpop.f32.mrb[0].mxu0
    %141 = vmatprep.mubr.f32.mxu0 0.0
    %142 = vmatmul.mubr.f32.gmra.mrb[0].mxu0 %v64
    %v143 = vpop.f32.mrb[0].mxu0
    %v144 = vadd.f32 %v56, %v143
    %v145 = vpop.f32.mrb[0].mxu0
    %146 = vmatprep.mubr.f32.mxu0 0.0
    %147 = vmatmul.mubr.f32.gmra.mrb[0].mxu0 %v67
    %v148 = vpop.f32.mrb[0].mxu0
    %v149 = vadd.f32 %v57, %v148
    %v150 = vpop.f32.mrb[0].mxu0
    %151 = vmatprep.mubr.f32.mxu0 0.0
    %152 = vmatmul.mubr.f32.gmra.mrb[0].mxu0 %v70
    %v153 = vpop.f32.mrb[0].mxu0
    %v154 = vadd.f32 %v58, %v153
    %v155 = vpop.f32.mrb[0].mxu0
    %156 = vdwg.mxu0
    %v157 = vld [vmem:[%s3] sm:$0xff]
    %v158 = vld [vmem:[%s3 + $0x8] sm:$0xff]
    %v159 = vld [vmem:[%s4] sm:$0x1]
    %v161 = vlaneseq
    %v162 = vshrl.u32 %v161, 7
    %v163 = vsub.s32 0, %v162
    %v164 = vrot.slane %v159, %v163
    %v167 = vsel %vm59, %v139, 0
    %v170 = vsel %vm59, %v144, 0
    %v173 = vsel %vm59, %v149, 0
    %v176 = vsel %vm59, %v154, 0
    %178 = vmatprep.subr.mxu0 0.0
    %179 = vmatpush1.msra.mxu0 %v157
    %180 = vmatprep.subr.mxu0 0.0
    %181 = vmatpush1.msra.mxu0 %v158
    %182 = vmatprep.subr.mxu0 0.0
    %183 = vmatpush1.msra.mxu0 0.0
    %184 = vmatprep.subr.mxu0 0.0
    %185 = vmatpush1.msra.mxu0 0.0
    %186 = vmatprep.subr.mxu0 0.0
    %187 = vmatpush1.msra.mxu0 0.0
    %188 = vmatprep.subr.mxu0 0.0
    %189 = vmatpush1.msra.mxu0 0.0
    %190 = vmatprep.subr.mxu0 0.0
    %191 = vmatpush1.msra.mxu0 0.0
    %192 = vmatprep.subr.mxu0 0.0
    %193 = vmatpush1.msra.mxu0 0.0
    %194 = vmatprep.subr.mxu0 0.0
    %195 = vmatpush1.msra.mxu0 0.0
    %196 = vmatprep.subr.mxu0 0.0
    %197 = vmatpush1.msra.mxu0 0.0
    %198 = vmatprep.subr.mxu0 0.0
    %199 = vmatpush1.msra.mxu0 0.0
    %200 = vmatprep.subr.mxu0 0.0
    %201 = vmatpush1.msra.mxu0 0.0
    %202 = vmatprep.subr.mxu0 0.0
    %203 = vmatpush1.msra.mxu0 0.0
    %204 = vmatprep.subr.mxu0 0.0
    %205 = vmatpush1.msra.mxu0 0.0
    %206 = vmatprep.subr.mxu0 0.0
    %207 = vmatpush1.msra.mxu0 0.0
    %208 = vmatprep.subr.mxu0 0.0
    %209 = vmatpush1.msra.mxu0 0.0
    %210 = vmatprep.subr.mxu0 0.0
    %211 = vmatpush1.msra.mxu0 0.0
    %212 = vmatprep.subr.mxu0 0.0
    %213 = vmatpush1.msra.mxu0 0.0
    %214 = vmatprep.subr.mxu0 0.0
    %215 = vmatpush1.msra.mxu0 0.0
    %216 = vmatprep.subr.mxu0 0.0
    %217 = vmatpush1.msra.mxu0 0.0
    %218 = vmatprep.subr.mxu0 0.0
    %219 = vmatpush1.msra.mxu0 0.0
    %220 = vmatprep.subr.mxu0 0.0
    %221 = vmatpush1.msra.mxu0 0.0
    %222 = vmatprep.subr.mxu0 0.0
    %223 = vmatpush1.msra.mxu0 0.0
    %224 = vmatprep.subr.mxu0 0.0
    %225 = vmatpush1.msra.mxu0 0.0
    %226 = vmatprep.subr.mxu0 0.0
    %227 = vmatpush1.msra.mxu0 0.0
    %228 = vmatprep.subr.mxu0 0.0
    %229 = vmatpush1.msra.mxu0 0.0
    %230 = vmatprep.subr.mxu0 0.0
    %231 = vmatpush1.msra.mxu0 0.0
    %232 = vmatprep.subr.mxu0 0.0
    %233 = vmatpush1.msra.mxu0 0.0
    %234 = vmatprep.subr.mxu0 0.0
    %235 = vmatpush1.msra.mxu0 0.0
    %236 = vmatprep.subr.mxu0 0.0
    %237 = vmatpush1.msra.mxu0 0.0
    %238 = vmatprep.subr.mxu0 0.0
    %239 = vmatpush1.msra.mxu0 0.0
    %240 = vmatprep.subr.mxu0 0.0
    %241 = vmatpush1.msra.mxu0 0.0
    %242 = vmatprep.mubr.f32.mxu0 0.0
    %243 = vmatmul.mubr.f32.gmra.mrb[0].mxu0 %v167
    %v244 = vpop.f32.mrb[0].mxu0
    %v245 = vadd.f32 %v164, %v244
    %v246 = vpop.f32.mrb[0].mxu0
    %247 = vmatprep.mubr.f32.mxu0 0.0
    %248 = vmatmul.mubr.f32.gmra.mrb[0].mxu0 %v170
    %v249 = vpop.f32.mrb[0].mxu0
    %v250 = vadd.f32 %v164, %v249
    %v251 = vpop.f32.mrb[0].mxu0
    %252 = vmatprep.mubr.f32.mxu0 0.0
    %253 = vmatmul.mubr.f32.gmra.mrb[0].mxu0 %v173
    %v254 = vpop.f32.mrb[0].mxu0
    %v255 = vadd.f32 %v164, %v254
    %v256 = vpop.f32.mrb[0].mxu0
    %257 = vmatprep.mubr.f32.mxu0 0.0
    %258 = vmatmul.mubr.f32.gmra.mrb[0].mxu0 %v176
    %v259 = vpop.f32.mrb[0].mxu0
    %v260 = vadd.f32 %v164, %v259
    %v261 = vpop.f32.mrb[0].mxu0
    %262 = vdwg.mxu0
    %265 = vrot.lane.b32.xlu0 %v245, 112
    %v266 = vpop.permute.xlu0 %265
    %267 = vrot.lane.b32.xlu0 %v250, 112
    %v268 = vpop.permute.xlu0 %267
    %vm269 = vcmask 64512
    %v270 = vsel %vm269, %v245, 0
    %v272 = vsel %vm269, %v250, 0
    %v274 = vsel %vm269, %v266, 0
    %v276 = vsel %vm269, %v268, 0
    %278 = vmatprep.subr.mxu0 0.0
    %279 = vmatpush1.xpose.msra.mxu0 %v274
    %280 = vmatprep.subr.mxu0 0.0
    %281 = vmatpush1.xpose.msra.mxu0 %v276
    %282 = vmatprep.subr.mxu0 0.0
    %283 = vmatpush1.xpose.msra.mxu0 0.0
    %284 = vmatprep.subr.mxu0 0.0
    %285 = vmatpush1.xpose.msra.mxu0 0.0
    %286 = vmatprep.subr.mxu0 0.0
    %287 = vmatpush1.xpose.msra.mxu0 0.0
    %288 = vmatprep.subr.mxu0 0.0
    %289 = vmatpush1.xpose.msra.mxu0 0.0
    %290 = vmatprep.subr.mxu0 0.0
    %291 = vmatpush1.xpose.msra.mxu0 0.0
    %292 = vmatprep.subr.mxu0 0.0
    %293 = vmatpush1.xpose.msra.mxu0 0.0
    %294 = vmatprep.subr.mxu0 0.0
    %295 = vmatpush1.xpose.msra.mxu0 0.0
    %296 = vmatprep.subr.mxu0 0.0
    %297 = vmatpush1.xpose.msra.mxu0 0.0
    %298 = vmatprep.subr.mxu0 0.0
    %299 = vmatpush1.xpose.msra.mxu0 0.0
    %300 = vmatprep.subr.mxu0 0.0
    %301 = vmatpush1.xpose.msra.mxu0 0.0
    %302 = vmatprep.subr.mxu0 0.0
    %303 = vmatpush1.xpose.msra.mxu0 0.0
    %304 = vmatprep.subr.mxu0 0.0
    %305 = vmatpush1.xpose.msra.mxu0 0.0
    %306 = vmatprep.subr.mxu0 0.0
    %307 = vmatpush1.xpose.msra.mxu0 0.0
    %308 = vmatprep.subr.mxu0 0.0
    %309 = vmatpush1.xpose.msra.mxu0 0.0
    %310 = vmatprep.subr.mxu0 0.0
    %311 = vmatpush1.xpose.msra.mxu0 0.0
    %312 = vmatprep.subr.mxu0 0.0
    %313 = vmatpush1.xpose.msra.mxu0 0.0
    %314 = vmatprep.subr.mxu0 0.0
    %315 = vmatpush1.xpose.msra.mxu0 0.0
    %316 = vmatprep.subr.mxu0 0.0
    %317 = vmatpush1.xpose.msra.mxu0 0.0
    %318 = vmatprep.subr.mxu0 0.0
    %319 = vmatpush1.xpose.msra.mxu0 0.0
    %320 = vmatprep.subr.mxu0 0.0
    %321 = vmatpush1.xpose.msra.mxu0 0.0
    %322 = vmatprep.subr.mxu0 0.0
    %323 = vmatpush1.xpose.msra.mxu0 0.0
    %324 = vmatprep.subr.mxu0 0.0
    %325 = vmatpush1.xpose.msra.mxu0 0.0
    %326 = vmatprep.subr.mxu0 0.0
    %327 = vmatpush1.xpose.msra.mxu0 0.0
    %328 = vmatprep.subr.mxu0 0.0
    %329 = vmatpush1.xpose.msra.mxu0 0.0
    %330 = vmatprep.subr.mxu0 0.0
    %331 = vmatpush1.xpose.msra.mxu0 0.0
    %332 = vmatprep.subr.mxu0 0.0
    %333 = vmatpush1.xpose.msra.mxu0 0.0
    %334 = vmatprep.subr.mxu0 0.0
    %335 = vmatpush1.xpose.msra.mxu0 0.0
    %336 = vmatprep.subr.mxu0 0.0
    %337 = vmatpush1.xpose.msra.mxu0 0.0
    %338 = vmatprep.subr.mxu0 0.0
    %339 = vmatpush1.xpose.msra.mxu0 0.0
    %340 = vmatprep.subr.mxu0 0.0
    %341 = vmatpush1.xpose.msra.mxu0 0.0
    %342 = vmatprep.mubr.f32.mxu0 0.0
    %343 = vmatmul.mubr.f32.gmra.mrb[0].mxu0 %v270
    %v344 = vpop.f32.mrb[0].mxu0
    %v345 = vadd.f32 0.0, %v344
    %v346 = vpop.f32.mrb[0].mxu0
    %347 = vmatprep.mubr.f32.mxu0 0.0
    %348 = vmatmul.mubr.f32.gmra.mrb[0].mxu0 %v272
    %v349 = vpop.f32.mrb[0].mxu0
    %v350 = vadd.f32 0.0, %v349
    %v351 = vpop.f32.mrb[0].mxu0
    %352 = vdwg.mxu0
    %v353 = vmul.f32 %v345, 0.35355338
    %v354 = vmul.f32 %v350, 0.35355338
    %v355 = vsel %vm59, %v353, -inf
    %356 = vmax.xlane.f32.xlu0 %v355
    %v357 = vpop.xlane.xlu0 %356
    %v358 = vsel %vm59, %v354, -inf
    %359 = vmax.xlane.f32.xlu0 %v358
    %v360 = vpop.xlane.xlu0 %359
    %v361 = vsub.f32 %v353, %v357
    %v362 = vsub.f32 %v354, %v360
    %v363 = vmul.f32 %v361, 1.442695
    %v364 = vpow.pop %v363
    %v365 = vmul.f32 %v362, 1.442695
    %v366 = vpow.pop %v365
    %v367 = vsel %vm59, %v364, 0.0
    %368 = vadd.xlane.f32.xlu0 %v367
    %v369 = vpop.xlane.xlu0 %368
    %v370 = vsel %vm59, %v366, 0.0
    %371 = vadd.xlane.f32.xlu0 %v370
    %v372 = vpop.xlane.xlu0 %371
    %v373 = vrcp.pop %v369
    %v374 = vrcp.pop %v372
    %v375 = vmul.f32 %v364, %v373
    %v376 = vmul.f32 %v366, %v374
    %v377 = vadd.f32 %v375, 0.0
    %v378 = vadd.f32 %v376, 0.0
    %379 = vrot.lane.b32.xlu0 %v245, 120
    %v380 = vpop.permute.xlu0 %379
    %381 = vrot.lane.b32.xlu0 %v250, 120
    %v382 = vpop.permute.xlu0 %381
    %383 = vrot.lane.b32.xlu0 %v245, 104
    %v384 = vpop.permute.xlu0 %383
    %385 = vrot.lane.b32.xlu0 %v250, 104
    %v386 = vpop.permute.xlu0 %385
    %v387 = vsel %vm269, %v380, 0
    %v389 = vsel %vm269, %v382, 0
    %v391 = vsel %vm269, %v384, 0
    %v393 = vsel %vm269, %v386, 0
    %395 = vmatprep.subr.mxu0 0.0
    %396 = vmatpush1.xpose.msra.mxu0 %v391
    %397 = vmatprep.subr.mxu0 0.0
    %398 = vmatpush1.xpose.msra.mxu0 %v393
    %399 = vmatprep.subr.mxu0 0.0
    %400 = vmatpush1.xpose.msra.mxu0 0.0
    %401 = vmatprep.subr.mxu0 0.0
    %402 = vmatpush1.xpose.msra.mxu0 0.0
    %403 = vmatprep.subr.mxu0 0.0
    %404 = vmatpush1.xpose.msra.mxu0 0.0
    %405 = vmatprep.subr.mxu0 0.0
    %406 = vmatpush1.xpose.msra.mxu0 0.0
    %407 = vmatprep.subr.mxu0 0.0
    %408 = vmatpush1.xpose.msra.mxu0 0.0
    %409 = vmatprep.subr.mxu0 0.0
    %410 = vmatpush1.xpose.msra.mxu0 0.0
    %411 = vmatprep.subr.mxu0 0.0
    %412 = vmatpush1.xpose.msra.mxu0 0.0
    %413 = vmatprep.subr.mxu0 0.0
    %414 = vmatpush1.xpose.msra.mxu0 0.0
    %415 = vmatprep.subr.mxu0 0.0
    %416 = vmatpush1.xpose.msra.mxu0 0.0
    %417 = vmatprep.subr.mxu0 0.0
    %418 = vmatpush1.xpose.msra.mxu0 0.0
    %419 = vmatprep.subr.mxu0 0.0
    %420 = vmatpush1.xpose.msra.mxu0 0.0
    %421 = vmatprep.subr.mxu0 0.0
    %422 = vmatpush1.xpose.msra.mxu0 0.0
    %423 = vmatprep.subr.mxu0 0.0
    %424 = vmatpush1.xpose.msra.mxu0 0.0
    %425 = vmatprep.subr.mxu0 0.0
    %426 = vmatpush1.xpose.msra.mxu0 0.0
    %427 = vmatprep.subr.mxu0 0.0
    %428 = vmatpush1.xpose.msra.mxu0 0.0
    %429 = vmatprep.subr.mxu0 0.0
    %430 = vmatpush1.xpose.msra.mxu0 0.0
    %431 = vmatprep.subr.mxu0 0.0
    %432 = vmatpush1.xpose.msra.mxu0 0.0
    %433 = vmatprep.subr.mxu0 0.0
    %434 = vmatpush1.xpose.msra.mxu0 0.0
    %435 = vmatprep.subr.mxu0 0.0
    %436 = vmatpush1.xpose.msra.mxu0 0.0
    %437 = vmatprep.subr.mxu0 0.0
    %438 = vmatpush1.xpose.msra.mxu0 0.0
    %439 = vmatprep.subr.mxu0 0.0
    %440 = vmatpush1.xpose.msra.mxu0 0.0
    %441 = vmatprep.subr.mxu0 0.0
    %442 = vmatpush1.xpose.msra.mxu0 0.0
    %443 = vmatprep.subr.mxu0 0.0
    %444 = vmatpush1.xpose.msra.mxu0 0.0
    %445 = vmatprep.subr.mxu0 0.0
    %446 = vmatpush1.xpose.msra.mxu0 0.0
    %447 = vmatprep.subr.mxu0 0.0
    %448 = vmatpush1.xpose.msra.mxu0 0.0
    %449 = vmatprep.subr.mxu0 0.0
    %450 = vmatpush1.xpose.msra.mxu0 0.0
    %451 = vmatprep.subr.mxu0 0.0
    %452 = vmatpush1.xpose.msra.mxu0 0.0
    %453 = vmatprep.subr.mxu0 0.0
    %454 = vmatpush1.xpose.msra.mxu0 0.0
    %455 = vmatprep.subr.mxu0 0.0
    %456 = vmatpush1.xpose.msra.mxu0 0.0
    %457 = vmatprep.subr.mxu0 0.0
    %458 = vmatpush1.xpose.msra.mxu0 0.0
    %459 = vmatprep.mubr.f32.mxu0 0.0
    %460 = vmatmul.mubr.f32.gmra.mrb[0].mxu0 %v387
    %v461 = vpop.f32.mrb[0].mxu0
    %v462 = vadd.f32 0.0, %v461
    %v463 = vpop.f32.mrb[0].mxu0
    %464 = vmatprep.mubr.f32.mxu0 0.0
    %465 = vmatmul.mubr.f32.gmra.mrb[0].mxu0 %v389
    %v466 = vpop.f32.mrb[0].mxu0
    %v467 = vadd.f32 0.0, %v466
    %v468 = vpop.f32.mrb[0].mxu0
    %469 = vdwg.mxu0
    %v470 = vmul.f32 %v462, 0.35355338
    %v471 = vmul.f32 %v467, 0.35355338
    %v472 = vsel %vm59, %v470, -inf
    %473 = vmax.xlane.f32.xlu0 %v472
    %v474 = vpop.xlane.xlu0 %473
    %v475 = vsel %vm59, %v471, -inf
    %476 = vmax.xlane.f32.xlu0 %v475
    %v477 = vpop.xlane.xlu0 %476
    %v478 = vsub.f32 %v470, %v474
    %v479 = vsub.f32 %v471, %v477
    %v480 = vmul.f32 %v478, 1.442695
    %v481 = vpow.pop %v480
    %v482 = vmul.f32 %v479, 1.442695
    %v483 = vpow.pop %v482
    %v484 = vsel %vm59, %v481, 0.0
    %485 = vadd.xlane.f32.xlu0 %v484
    %v486 = vpop.xlane.xlu0 %485
    %v487 = vsel %vm59, %v483, 0.0
    %488 = vadd.xlane.f32.xlu0 %v487
    %v489 = vpop.xlane.xlu0 %488
    %v490 = vrcp.pop %v486
    %v491 = vrcp.pop %v489
    %v492 = vmul.f32 %v481, %v490
    %v493 = vmul.f32 %v483, %v491
    %v494 = vadd.f32 %v377, %v492
    %v495 = vadd.f32 %v378, %v493
    %498 = vrot.lane.b32.xlu0 %v255, 112
    %v499 = vpop.permute.xlu0 %498
    %500 = vrot.lane.b32.xlu0 %v260, 112
    %v501 = vpop.permute.xlu0 %500
    %v502 = vsel %vm269, %v255, 0
    %v504 = vsel %vm269, %v260, 0
    %v506 = vsel %vm269, %v499, 0
    %v508 = vsel %vm269, %v501, 0
    %510 = vmatprep.subr.mxu0 0.0
    %511 = vmatpush1.xpose.msra.mxu0 %v506
    %512 = vmatprep.subr.mxu0 0.0
    %513 = vmatpush1.xpose.msra.mxu0 %v508
    %514 = vmatprep.subr.mxu0 0.0
    %515 = vmatpush1.xpose.msra.mxu0 0.0
    %516 = vmatprep.subr.mxu0 0.0
    %517 = vmatpush1.xpose.msra.mxu0 0.0
    %518 = vmatprep.subr.mxu0 0.0
    %519 = vmatpush1.xpose.msra.mxu0 0.0
    %520 = vmatprep.subr.mxu0 0.0
    %521 = vmatpush1.xpose.msra.mxu0 0.0
    %522 = vmatprep.subr.mxu0 0.0
    %523 = vmatpush1.xpose.msra.mxu0 0.0
    %524 = vmatprep.subr.mxu0 0.0
    %525 = vmatpush1.xpose.msra.mxu0 0.0
    %526 = vmatprep.subr.mxu0 0.0
    %527 = vmatpush1.xpose.msra.mxu0 0.0
    %528 = vmatprep.subr.mxu0 0.0
    %529 = vmatpush1.xpose.msra.mxu0 0.0
    %530 = vmatprep.subr.mxu0 0.0
    %531 = vmatpush1.xpose.msra.mxu0 0.0
    %532 = vmatprep.subr.mxu0 0.0
    %533 = vmatpush1.xpose.msra.mxu0 0.0
    %534 = vmatprep.subr.mxu0 0.0
    %535 = vmatpush1.xpose.msra.mxu0 0.0
    %536 = vmatprep.subr.mxu0 0.0
    %537 = vmatpush1.xpose.msra.mxu0 0.0
    %538 = vmatprep.subr.mxu0 0.0
    %539 = vmatpush1.xpose.msra.mxu0 0.0
    %540 = vmatprep.subr.mxu0 0.0
    %541 = vmatpush1.xpose.msra.mxu0 0.0
    %542 = vmatprep.subr.mxu0 0.0
    %543 = vmatpush1.xpose.msra.mxu0 0.0
    %544 = vmatprep.subr.mxu0 0.0
    %545 = vmatpush1.xpose.msra.mxu0 0.0
    %546 = vmatprep.subr.mxu0 0.0
    %547 = vmatpush1.xpose.msra.mxu0 0.0
    %548 = vmatprep.subr.mxu0 0.0
    %549 = vmatpush1.xpose.msra.mxu0 0.0
    %550 = vmatprep.subr.mxu0 0.0
    %551 = vmatpush1.xpose.msra.mxu0 0.0
    %552 = vmatprep.subr.mxu0 0.0
    %553 = vmatpush1.xpose.msra.mxu0 0.0
    %554 = vmatprep.subr.mxu0 0.0
    %555 = vmatpush1.xpose.msra.mxu0 0.0
    %556 = vmatprep.subr.mxu0 0.0
    %557 = vmatpush1.xpose.msra.mxu0 0.0
    %558 = vmatprep.subr.mxu0 0.0
    %559 = vmatpush1.xpose.msra.mxu0 0.0
    %560 = vmatprep.subr.mxu0 0.0
    %561 = vmatpush1.xpose.msra.mxu0 0.0
    %562 = vmatprep.subr.mxu0 0.0
    %563 = vmatpush1.xpose.msra.mxu0 0.0
    %564 = vmatprep.subr.mxu0 0.0
    %565 = vmatpush1.xpose.msra.mxu0 0.0
    %566 = vmatprep.subr.mxu0 0.0
    %567 = vmatpush1.xpose.msra.mxu0 0.0
    %568 = vmatprep.subr.mxu0 0.0
    %569 = vmatpush1.xpose.msra.mxu0 0.0
    %570 = vmatprep.subr.mxu0 0.0
    %571 = vmatpush1.xpose.msra.mxu0 0.0
    %572 = vmatprep.subr.mxu0 0.0
    %573 = vmatpush1.xpose.msra.mxu0 0.0
    %574 = vmatprep.mubr.f32.mxu0 0.0
    %575 = vmatmul.mubr.f32.gmra.mrb[0].mxu0 %v502
    %v576 = vpop.f32.mrb[0].mxu0
    %v577 = vadd.f32 0.0, %v576
    %v578 = vpop.f32.mrb[0].mxu0
    %579 = vmatprep.mubr.f32.mxu0 0.0
    %580 = vmatmul.mubr.f32.gmra.mrb[0].mxu0 %v504
    %v581 = vpop.f32.mrb[0].mxu0
    %v582 = vadd.f32 0.0, %v581
    %v583 = vpop.f32.mrb[0].mxu0
    %584 = vdwg.mxu0
    %v585 = vmul.f32 %v577, 0.35355338
    %v586 = vmul.f32 %v582, 0.35355338
    %v587 = vsel %vm59, %v585, -inf
    %588 = vmax.xlane.f32.xlu0 %v587
    %v589 = vpop.xlane.xlu0 %588
    %v590 = vsel %vm59, %v586, -inf
    %591 = vmax.xlane.f32.xlu0 %v590
    %v592 = vpop.xlane.xlu0 %591
    %v593 = vsub.f32 %v585, %v589
    %v594 = vsub.f32 %v586, %v592
    %v595 = vmul.f32 %v593, 1.442695
    %v596 = vpow.pop %v595
    %v597 = vmul.f32 %v594, 1.442695
    %v598 = vpow.pop %v597
    %v599 = vsel %vm59, %v596, 0.0
    %600 = vadd.xlane.f32.xlu0 %v599
    %v601 = vpop.xlane.xlu0 %600
    %v602 = vsel %vm59, %v598, 0.0
    %603 = vadd.xlane.f32.xlu0 %v602
    %v604 = vpop.xlane.xlu0 %603
    %v605 = vrcp.pop %v601
    %v606 = vrcp.pop %v604
    %v607 = vmul.f32 %v596, %v605
    %v608 = vmul.f32 %v598, %v606
    %v609 = vadd.f32 %v494, %v607
    %v610 = vadd.f32 %v495, %v608
    %611 = vrot.lane.b32.xlu0 %v255, 120
    %v612 = vpop.permute.xlu0 %611
    %613 = vrot.lane.b32.xlu0 %v260, 120
    %v614 = vpop.permute.xlu0 %613
    %615 = vrot.lane.b32.xlu0 %v255, 104
    %v616 = vpop.permute.xlu0 %615
    %617 = vrot.lane.b32.xlu0 %v260, 104
    %v618 = vpop.permute.xlu0 %617
    %v619 = vsel %vm269, %v612, 0
    %v621 = vsel %vm269, %v614, 0
    %v623 = vsel %vm269, %v616, 0
    %v625 = vsel %vm269, %v618, 0
    %627 = vmatprep.subr.mxu0 0.0
    %628 = vmatpush1.xpose.msra.mxu0 %v623
    %629 = vmatprep.subr.mxu0 0.0
    %630 = vmatpush1.xpose.msra.mxu0 %v625
    %631 = vmatprep.subr.mxu0 0.0
    %632 = vmatpush1.xpose.msra.mxu0 0.0
    %633 = vmatprep.subr.mxu0 0.0
    %634 = vmatpush1.xpose.msra.mxu0 0.0
    %635 = vmatprep.subr.mxu0 0.0
    %636 = vmatpush1.xpose.msra.mxu0 0.0
    %637 = vmatprep.subr.mxu0 0.0
    %638 = vmatpush1.xpose.msra.mxu0 0.0
    %639 = vmatprep.subr.mxu0 0.0
    %640 = vmatpush1.xpose.msra.mxu0 0.0
    %641 = vmatprep.subr.mxu0 0.0
    %642 = vmatpush1.xpose.msra.mxu0 0.0
    %643 = vmatprep.subr.mxu0 0.0
    %644 = vmatpush1.xpose.msra.mxu0 0.0
    %645 = vmatprep.subr.mxu0 0.0
    %646 = vmatpush1.xpose.msra.mxu0 0.0
    %647 = vmatprep.subr.mxu0 0.0
    %648 = vmatpush1.xpose.msra.mxu0 0.0
    %649 = vmatprep.subr.mxu0 0.0
    %650 = vmatpush1.xpose.msra.mxu0 0.0
    %651 = vmatprep.subr.mxu0 0.0
    %652 = vmatpush1.xpose.msra.mxu0 0.0
    %653 = vmatprep.subr.mxu0 0.0
    %654 = vmatpush1.xpose.msra.mxu0 0.0
    %655 = vmatprep.subr.mxu0 0.0
    %656 = vmatpush1.xpose.msra.mxu0 0.0
    %657 = vmatprep.subr.mxu0 0.0
    %658 = vmatpush1.xpose.msra.mxu0 0.0
    %659 = vmatprep.subr.mxu0 0.0
    %660 = vmatpush1.xpose.msra.mxu0 0.0
    %661 = vmatprep.subr.mxu0 0.0
    %662 = vmatpush1.xpose.msra.mxu0 0.0
    %663 = vmatprep.subr.mxu0 0.0
    %664 = vmatpush1.xpose.msra.mxu0 0.0
    %665 = vmatprep.subr.mxu0 0.0
    %666 = vmatpush1.xpose.msra.mxu0 0.0
    %667 = vmatprep.subr.mxu0 0.0
    %668 = vmatpush1.xpose.msra.mxu0 0.0
    %669 = vmatprep.subr.mxu0 0.0
    %670 = vmatpush1.xpose.msra.mxu0 0.0
    %671 = vmatprep.subr.mxu0 0.0
    %672 = vmatpush1.xpose.msra.mxu0 0.0
    %673 = vmatprep.subr.mxu0 0.0
    %674 = vmatpush1.xpose.msra.mxu0 0.0
    %675 = vmatprep.subr.mxu0 0.0
    %676 = vmatpush1.xpose.msra.mxu0 0.0
    %677 = vmatprep.subr.mxu0 0.0
    %678 = vmatpush1.xpose.msra.mxu0 0.0
    %679 = vmatprep.subr.mxu0 0.0
    %680 = vmatpush1.xpose.msra.mxu0 0.0
    %681 = vmatprep.subr.mxu0 0.0
    %682 = vmatpush1.xpose.msra.mxu0 0.0
    %683 = vmatprep.subr.mxu0 0.0
    %684 = vmatpush1.xpose.msra.mxu0 0.0
    %685 = vmatprep.subr.mxu0 0.0
    %686 = vmatpush1.xpose.msra.mxu0 0.0
    %687 = vmatprep.subr.mxu0 0.0
    %688 = vmatpush1.xpose.msra.mxu0 0.0
    %689 = vmatprep.subr.mxu0 0.0
    %690 = vmatpush1.xpose.msra.mxu0 0.0
    %691 = vmatprep.mubr.f32.mxu0 0.0
    %692 = vmatmul.mubr.f32.gmra.mrb[0].mxu0 %v619
    %v693 = vpop.f32.mrb[0].mxu0
    %v694 = vadd.f32 0.0, %v693
    %v695 = vpop.f32.mrb[0].mxu0
    %696 = vmatprep.mubr.f32.mxu0 0.0
    %697 = vmatmul.mubr.f32.gmra.mrb[0].mxu0 %v621
    %v698 = vpop.f32.mrb[0].mxu0
    %v699 = vadd.f32 0.0, %v698
    %v700 = vpop.f32.mrb[0].mxu0
    %701 = vdwg.mxu0
    %v702 = vmul.f32 %v694, 0.35355338
    %v703 = vmul.f32 %v699, 0.35355338
    %v704 = vsel %vm59, %v702, -inf
    %705 = vmax.xlane.f32.xlu0 %v704
    %v706 = vpop.xlane.xlu0 %705
    %v707 = vsel %vm59, %v703, -inf
    %708 = vmax.xlane.f32.xlu0 %v707
    %v709 = vpop.xlane.xlu0 %708
    %v710 = vsub.f32 %v702, %v706
    %v711 = vsub.f32 %v703, %v709
    %v712 = vmul.f32 %v710, 1.442695
    %v713 = vpow.pop %v712
    %v714 = vmul.f32 %v711, 1.442695
    %v715 = vpow.pop %v714
    %v716 = vsel %vm59, %v713, 0.0
    %717 = vadd.xlane.f32.xlu0 %v716
    %v718 = vpop.xlane.xlu0 %717
    %v719 = vsel %vm59, %v715, 0.0
    %720 = vadd.xlane.f32.xlu0 %v719
    %v721 = vpop.xlane.xlu0 %720
    %v722 = vrcp.pop %v718
    %v723 = vrcp.pop %v721
    %v724 = vmul.f32 %v713, %v722
    %v725 = vmul.f32 %v715, %v723
    %v726 = vadd.f32 %v609, %v724
    %v727 = vadd.f32 %v610, %v725
    %v728 = vmul.f32 %v726, 0.25
    %v729 = vmul.f32 %v727, 0.25
    %730 = vst.msk [vmem:[#allocation4] sm:$0xff] %vm59, %v728
    %731 = vst.msk [vmem:[#allocation4 + $0x8] sm:$0xff] %vm59, %v729
    %v732 = vsel %vm59, %v728, 0.0
    %733 = vadd.xlane.f32.xlu0 %v732
    %v734 = vpop.xlane.xlu0 %733
    %v735 = vsel %vm59, %v729, 0.0
    %736 = vadd.xlane.f32.xlu0 %v735
    %v737 = vpop.xlane.xlu0 %736
    %vm738 = vcmp.eq.f32.partialorder %v734, 0.0
    %vm739 = vcmp.eq.f32.partialorder %v737, 0.0
    %v740 = vsel %vm738, 1.0, %v734
    %v741 = vsel %vm739, 1.0, %v737
    %v742 = vrcp.pop %v740
    %v743 = vmul.f32 %v728, %v742
    %v744 = vrcp.pop %v741
    %v745 = vmul.f32 %v729, %v744
    loop: start=0, step=1, limit=100
    $region54: #{sapl_forward.1} parent=1 // loop_pre_header
      _
    $region55: #{sapl_forward.1} parent=1 // loop_header
      %s747 = sphi 0, %s751
      %p748 = scmp.ge.s32.totalorder %s747, 100
      %v752 = vphi 0.0625, %v827
    $region56: #{sapl_forward.1} parent=1 // loop_header_branch
      %750 = sbr.rel (%p748) target = $region60
    $region57: #{sapl_forward.1} parent=1 // loop_body
      %v754 = vsel %vm59, %v752, 0
      %756 = vmatprep.subr.mxu0 0.0
      %757 = vmatpush1.msra.mxu0 %v743
      %758 = vmatprep.subr.mxu0 0.0
      %759 = vmatpush1.msra.mxu0 %v745
      %760 = vmatprep.subr.mxu0 0.0
      %761 = vmatpush1.msra.mxu0 0.0
      %762 = vmatprep.subr.mxu0 0.0
      %763 = vmatpush1.msra.mxu0 0.0
      %764 = vmatprep.subr.mxu0 0.0
      %765 = vmatpush1.msra.mxu0 0.0
      %766 = vmatprep.subr.mxu0 0.0
      %767 = vmatpush1.msra.mxu0 0.0
      %768 = vmatprep.subr.mxu0 0.0
      %769 = vmatpush1.msra.mxu0 0.0
      %770 = vmatprep.subr.mxu0 0.0
      %771 = vmatpush1.msra.mxu0 0.0
      %772 = vmatprep.subr.mxu0 0.0
      %773 = vmatpush1.msra.mxu0 0.0
      %774 = vmatprep.subr.mxu0 0.0
      %775 = vmatpush1.msra.mxu0 0.0
      %776 = vmatprep.subr.mxu0 0.0
      %777 = vmatpush1.msra.mxu0 0.0
      %778 = vmatprep.subr.mxu0 0.0
      %779 = vmatpush1.msra.mxu0 0.0
      %780 = vmatprep.subr.mxu0 0.0
      %781 = vmatpush1.msra.mxu0 0.0
      %782 = vmatprep.subr.mxu0 0.0
      %783 = vmatpush1.msra.mxu0 0.0
      %784 = vmatprep.subr.mxu0 0.0
      %785 = vmatpush1.msra.mxu0 0.0
      %786 = vmatprep.subr.mxu0 0.0
      %787 = vmatpush1.msra.mxu0 0.0
      %788 = vmatprep.subr.mxu0 0.0
      %789 = vmatpush1.msra.mxu0 0.0
      %790 = vmatprep.subr.mxu0 0.0
      %791 = vmatpush1.msra.mxu0 0.0
      %792 = vmatprep.subr.mxu0 0.0
      %793 = vmatpush1.msra.mxu0 0.0
      %794 = vmatprep.subr.mxu0 0.0
      %795 = vmatpush1.msra.mxu0 0.0
      %796 = vmatprep.subr.mxu0 0.0
      %797 = vmatpush1.msra.mxu0 0.0
      %798 = vmatprep.subr.mxu0 0.0
      %799 = vmatpush1.msra.mxu0 0.0
      %800 = vmatprep.subr.mxu0 0.0
      %801 = vmatpush1.msra.mxu0 0.0
      %802 = vmatprep.subr.mxu0 0.0
      %803 = vmatpush1.msra.mxu0 0.0
      %804 = vmatprep.subr.mxu0 0.0
      %805 = vmatpush1.msra.mxu0 0.0
      %806 = vmatprep.subr.mxu0 0.0
      %807 = vmatpush1.msra.mxu0 0.0
      %808 = vmatprep.subr.mxu0 0.0
      %809 = vmatpush1.msra.mxu0 0.0
      %810 = vmatprep.subr.mxu0 0.0
      %811 = vmatpush1.msra.mxu0 0.0
      %812 = vmatprep.subr.mxu0 0.0
      %813 = vmatpush1.msra.mxu0 0.0
      %814 = vmatprep.subr.mxu0 0.0
      %815 = vmatpush1.msra.mxu0 0.0
      %816 = vmatprep.subr.mxu0 0.0
      %817 = vmatpush1.msra.mxu0 0.0
      %818 = vmatprep.subr.mxu0 0.0
      %819 = vmatpush1.msra.mxu0 0.0
      %820 = vmatprep.mubr.f32.mxu0 0.0
      %821 = vmatmul.mubr.f32.gmra.mrb[0].mxu0 %v754
      %v822 = vpop.f32.mrb[0].mxu0
      %v823 = vadd.f32 0.0, %v822
      %v824 = vpop.f32.mrb[0].mxu0
      %825 = vdwg.mxu0
      %v826 = vmul.f32 %v823, 0.85
      %v827 = vadd.f32 %v826, 0.009375
    $region58: #{sapl_forward.1} parent=1 // loop_footer
      %s751 = sadd.s32 1, %s747
    $region59: #{sapl_forward.1} parent=1 // loop_footer_branch
      %746 = sbr.rel target = $region55
    $region60: #{sapl_forward.1} parent=1 // loop_exit
      _
    %v828 = vlaneseq
    %v829 = vshrl.u32 %v828, 7
    %v830 = vsub.s32 0, %v829
    %v831 = vrot.slane %v752, %v830
    %832 = vxpose.xlu0.b32.start [1/16] %v831, 128
    %833 = vxpose.xlu0.b32.cont [2/16] %v831, 128
    %834 = vxpose.xlu0.b32.cont [3/16] 0.0, 128
    %835 = vxpose.xlu0.b32.cont [4/16] 0.0, 128
    %836 = vxpose.xlu0.b32.cont [5/16] 0.0, 128
    %837 = vxpose.xlu0.b32.cont [6/16] 0.0, 128
    %838 = vxpose.xlu0.b32.cont [7/16] 0.0, 128
    %839 = vxpose.xlu0.b32.cont [8/16] 0.0, 128
    %840 = vxpose.xlu0.b32.cont [9/16] 0.0, 128
    %841 = vxpose.xlu0.b32.cont [10/16] 0.0, 128
    %842 = vxpose.xlu0.b32.cont [11/16] 0.0, 128
    %843 = vxpose.xlu0.b32.cont [12/16] 0.0, 128
    %844 = vxpose.xlu0.b32.cont [13/16] 0.0, 128
    %845 = vxpose.xlu0.b32.cont [14/16] 0.0, 128
    %846 = vxpose.xlu0.b32.cont [15/16] 0.0, 128
    %847 = vxpose.xlu0.b32.end [16/16] 0.0, 128
    %v848 = vpop.trf.xlu0
    %v849 = vpop.trf.xlu0
    %v850 = vpop.trf.xlu0
    %v851 = vpop.trf.xlu0
    %v852 = vpop.trf.xlu0
    %v853 = vpop.trf.xlu0
    %v854 = vpop.trf.xlu0
    %v855 = vpop.trf.xlu0
    %v856 = vpop.trf.xlu0
    %v857 = vpop.trf.xlu0
    %v858 = vpop.trf.xlu0
    %v859 = vpop.trf.xlu0
    %v860 = vpop.trf.xlu0
    %v861 = vpop.trf.xlu0
    %v862 = vpop.trf.xlu0
    %v863 = vpop.trf.xlu0
    %vm864 = vcmp.lt.f32.partialorder %v848, %v831
    %vm865 = vcmp.lt.f32.partialorder %v849, %v831
    %v866 = vsel %vm864, 1, 0
    %v867 = vsel %vm865, 1, 0
    %v868 = vcvt.s32.f32 %v866
    %v869 = vcvt.s32.f32 %v867
    %v870 = vsel %vm59, %v868, 0.0
    %v871 = vsel %vm59, %v869, 0.0
    %v872 = vadd.f32 %v870, %v871
    %v873 = vrot.slane %v872, 4
    %v874 = vadd.f32 %v872, %v873
    %v875 = vrot.slane %v874, 2
    %v876 = vadd.f32 %v874, %v875
    %v877 = vrot.slane %v876, 1
    %v878 = vadd.f32 %v876, %v877
    %vm879 = vcmp.le.f32.partialorder %v878, 7.0
    %v880 = vsel %vm879, %v752, -inf
    %vm881 = vcmask 122880
    %v882 = vsel %vm881, %v880, -inf
    %883 = vmax.xlane.f32.xlu0 %v882
    %v884 = vpop.xlane.xlu0 %883
    %v885 = vrot.slane %v884, 4
    %v886 = vmax.f32 %v884, %v885
    %v887 = vrot.slane %v886, 2
    %v888 = vmax.f32 %v886, %v887
    %v889 = vrot.slane %v888, 1
    %v890 = vmax.f32 %v888, %v889
    %s891 = vtos %v890
    %v892 = vstv %s891
    %vm893 = vcmp.le.f32.partialorder %v752, %v892
    %v894 = vsel %vm893, 1, 0
    %v895 = vcvt.s32.f32 %v894
    %v896 = vsub.f32 1.0, %v895
    %897 = vst.msk [vmem:[%s15] sm:$0x1] %vm881, %v895
    %v898 = vlaneseq
    %v899 = vshrl.u32 %v898, 7
    %v900 = vsub.s32 0, %v899
    %v901 = vrot.slane %v896, %v900
    %v902 = vmul.f32 %v375, %v901
    %v903 = vmul.f32 %v376, %v901
    %904 = vrot.lane.b32.xlu0 %v245, 96
    %v905 = vpop.permute.xlu0 %904
    %906 = vrot.lane.b32.xlu0 %v250, 96
    %v907 = vpop.permute.xlu0 %906
    %v911 = vsel %vm59, %v902, 0
    %v914 = vsel %vm59, %v903, 0
    %916 = vmatprep.subr.mxu0 0.0
    %917 = vmatpush1.msra.mxu0 %v905
    %918 = vmatprep.subr.mxu0 0.0
    %919 = vmatpush1.msra.mxu0 %v907
    %920 = vmatprep.subr.mxu0 0.0
    %921 = vmatpush1.msra.mxu0 0.0
    %922 = vmatprep.subr.mxu0 0.0
    %923 = vmatpush1.msra.mxu0 0.0
    %924 = vmatprep.subr.mxu0 0.0
    %925 = vmatpush1.msra.mxu0 0.0
    %926 = vmatprep.subr.mxu0 0.0
    %927 = vmatpush1.msra.mxu0 0.0
    %928 = vmatprep.subr.mxu0 0.0
    %929 = vmatpush1.msra.mxu0 0.0
    %930 = vmatprep.subr.mxu0 0.0
    %931 = vmatpush1.msra.mxu0 0.0
    %932 = vmatprep.subr.mxu0 0.0
    %933 = vmatpush1.msra.mxu0 0.0
    %934 = vmatprep.subr.mxu0 0.0
    %935 = vmatpush1.msra.mxu0 0.0
    %936 = vmatprep.subr.mxu0 0.0
    %937 = vmatpush1.msra.mxu0 0.0
    %938 = vmatprep.subr.mxu0 0.0
    %939 = vmatpush1.msra.mxu0 0.0
    %940 = vmatprep.subr.mxu0 0.0
    %941 = vmatpush1.msra.mxu0 0.0
    %942 = vmatprep.subr.mxu0 0.0
    %943 = vmatpush1.msra.mxu0 0.0
    %944 = vmatprep.subr.mxu0 0.0
    %945 = vmatpush1.msra.mxu0 0.0
    %946 = vmatprep.subr.mxu0 0.0
    %947 = vmatpush1.msra.mxu0 0.0
    %948 = vmatprep.subr.mxu0 0.0
    %949 = vmatpush1.msra.mxu0 0.0
    %950 = vmatprep.subr.mxu0 0.0
    %951 = vmatpush1.msra.mxu0 0.0
    %952 = vmatprep.subr.mxu0 0.0
    %953 = vmatpush1.msra.mxu0 0.0
    %954 = vmatprep.subr.mxu0 0.0
    %955 = vmatpush1.msra.mxu0 0.0
    %956 = vmatprep.subr.mxu0 0.0
    %957 = vmatpush1.msra.mxu0 0.0
    %958 = vmatprep.subr.mxu0 0.0
    %959 = vmatpush1.msra.mxu0 0.0
    %960 = vmatprep.subr.mxu0 0.0
    %961 = vmatpush1.msra.mxu0 0.0
    %962 = vmatprep.subr.mxu0 0.0
    %963 = vmatpush1.msra.mxu0 0.0
    %964 = vmatprep.subr.mxu0 0.0
    %965 = vmatpush1.msra.mxu0 0.0
    %966 = vmatprep.subr.mxu0 0.0
    %967 = vmatpush1.msra.mxu0 0.0
    %968 = vmatprep.subr.mxu0 0.0
    %969 = vmatpush1.msra.mxu0 0.0
    %970 = vmatprep.subr.mxu0 0.0
    %971 = vmatpush1.msra.mxu0 0.0
    %972 = vmatprep.subr.mxu0 0.0
    %973 = vmatpush1.msra.mxu0 0.0
    %974 = vmatprep.subr.mxu0 0.0
    %975 = vmatpush1.msra.mxu0 0.0
    %976 = vmatprep.subr.mxu0 0.0
    %977 = vmatpush1.msra.mxu0 0.0
    %978 = vmatprep.subr.mxu0 0.0
    %979 = vmatpush1.msra.mxu0 0.0
    %980 = vmatprep.mubr.f32.mxu0 0.0
    %981 = vmatmul.mubr.f32.gmra.mrb[0].mxu0 %v911
    %v982 = vpop.f32.mrb[0].mxu0
    %v983 = vadd.f32 0.0, %v982
    %v984 = vpop.f32.mrb[0].mxu0
    %985 = vmatprep.mubr.f32.mxu0 0.0
    %986 = vmatmul.mubr.f32.gmra.mrb[0].mxu0 %v914
    %v987 = vpop.f32.mrb[0].mxu0
    %v988 = vadd.f32 0.0, %v987
    %v989 = vpop.f32.mrb[0].mxu0
    %990 = vdwg.mxu0
    %v991 = vmul.f32 %v492, %v901
    %v992 = vmul.f32 %v493, %v901
    %993 = vrot.lane.b32.xlu0 %v245, 88
    %v994 = vpop.permute.xlu0 %993
    %995 = vrot.lane.b32.xlu0 %v250, 88
    %v996 = vpop.permute.xlu0 %995
    %v1000 = vsel %vm59, %v991, 0
    %v1003 = vsel %vm59, %v992, 0
    %1005 = vmatprep.subr.mxu0 0.0
    %1006 = vmatpush1.msra.mxu0 %v994
    %1007 = vmatprep.subr.mxu0 0.0
    %1008 = vmatpush1.msra.mxu0 %v996
    %1009 = vmatprep.subr.mxu0 0.0
    %1010 = vmatpush1.msra.mxu0 0.0
    %1011 = vmatprep.subr.mxu0 0.0
    %1012 = vmatpush1.msra.mxu0 0.0
    %1013 = vmatprep.subr.mxu0 0.0
    %1014 = vmatpush1.msra.mxu0 0.0
    %1015 = vmatprep.subr.mxu0 0.0
    %1016 = vmatpush1.msra.mxu0 0.0
    %1017 = vmatprep.subr.mxu0 0.0
    %1018 = vmatpush1.msra.mxu0 0.0
    %1019 = vmatprep.subr.mxu0 0.0
    %1020 = vmatpush1.msra.mxu0 0.0
    %1021 = vmatprep.subr.mxu0 0.0
    %1022 = vmatpush1.msra.mxu0 0.0
    %1023 = vmatprep.subr.mxu0 0.0
    %1024 = vmatpush1.msra.mxu0 0.0
    %1025 = vmatprep.subr.mxu0 0.0
    %1026 = vmatpush1.msra.mxu0 0.0
    %1027 = vmatprep.subr.mxu0 0.0
    %1028 = vmatpush1.msra.mxu0 0.0
    %1029 = vmatprep.subr.mxu0 0.0
    %1030 = vmatpush1.msra.mxu0 0.0
    %1031 = vmatprep.subr.mxu0 0.0
    %1032 = vmatpush1.msra.mxu0 0.0
    %1033 = vmatprep.subr.mxu0 0.0
    %1034 = vmatpush1.msra.mxu0 0.0
    %1035 = vmatprep.subr.mxu0 0.0
    %1036 = vmatpush1.msra.mxu0 0.0
    %1037 = vmatprep.subr.mxu0 0.0
    %1038 = vmatpush1.msra.mxu0 0.0
    %1039 = vmatprep.subr.mxu0 0.0
    %1040 = vmatpush1.msra.mxu0 0.0
    %1041 = vmatprep.subr.mxu0 0.0
    %1042 = vmatpush1.msra.mxu0 0.0
    %1043 = vmatprep.subr.mxu0 0.0
    %1044 = vmatpush1.msra.mxu0 0.0
    %1045 = vmatprep.subr.mxu0 0.0
    %1046 = vmatpush1.msra.mxu0 0.0
    %1047 = vmatprep.subr.mxu0 0.0
    %1048 = vmatpush1.msra.mxu0 0.0
    %1049 = vmatprep.subr.mxu0 0.0
    %1050 = vmatpush1.msra.mxu0 0.0
    %1051 = vmatprep.subr.mxu0 0.0
    %1052 = vmatpush1.msra.mxu0 0.0
    %1053 = vmatprep.subr.mxu0 0.0
    %1054 = vmatpush1.msra.mxu0 0.0
    %1055 = vmatprep.subr.mxu0 0.0
    %1056 = vmatpush1.msra.mxu0 0.0
    %1057 = vmatprep.subr.mxu0 0.0
    %1058 = vmatpush1.msra.mxu0 0.0
    %1059 = vmatprep.subr.mxu0 0.0
    %1060 = vmatpush1.msra.mxu0 0.0
    %1061 = vmatprep.subr.mxu0 0.0
    %1062 = vmatpush1.msra.mxu0 0.0
    %1063 = vmatprep.subr.mxu0 0.0
    %1064 = vmatpush1.msra.mxu0 0.0
    %1065 = vmatprep.subr.mxu0 0.0
    %1066 = vmatpush1.msra.mxu0 0.0
    %1067 = vmatprep.subr.mxu0 0.0
    %1068 = vmatpush1.msra.mxu0 0.0
    %1069 = vmatprep.mubr.f32.mxu0 0.0
    %1070 = vmatmul.mubr.f32.gmra.mrb[0].mxu0 %v1000
    %v1071 = vpop.f32.mrb[0].mxu0
    %v1072 = vadd.f32 0.0, %v1071
    %v1073 = vpop.f32.mrb[0].mxu0
    %1074 = vmatprep.mubr.f32.mxu0 0.0
    %1075 = vmatmul.mubr.f32.gmra.mrb[0].mxu0 %v1003
    %v1076 = vpop.f32.mrb[0].mxu0
    %v1077 = vadd.f32 0.0, %v1076
    %v1078 = vpop.f32.mrb[0].mxu0
    %1079 = vdwg.mxu0
    %1082 = vrot.lane.b32.xlu0 %v1072, 8
    %v1083 = vpop.permute.xlu0 %1082
    %1084 = vrot.lane.b32.xlu0 %v1077, 8
    %v1085 = vpop.permute.xlu0 %1084
    %v1088 = vsel %vm269, %v983, %v1083
    %v1089 = vsel %vm269, %v988, %v1085
    %v1090 = vadd.f32 %v139, %v1088
    %v1091 = vadd.f32 %v144, %v1089
    %v1092 = vmul.f32 %v607, %v901
    %v1093 = vmul.f32 %v608, %v901
    %1094 = vrot.lane.b32.xlu0 %v255, 96
    %v1095 = vpop.permute.xlu0 %1094
    %1096 = vrot.lane.b32.xlu0 %v260, 96
    %v1097 = vpop.permute.xlu0 %1096
    %v1101 = vsel %vm59, %v1092, 0
    %v1104 = vsel %vm59, %v1093, 0
    %1106 = vmatprep.subr.mxu0 0.0
    %1107 = vmatpush1.msra.mxu0 %v1095
    %1108 = vmatprep.subr.mxu0 0.0
    %1109 = vmatpush1.msra.mxu0 %v1097
    %1110 = vmatprep.subr.mxu0 0.0
    %1111 = vmatpush1.msra.mxu0 0.0
    %1112 = vmatprep.subr.mxu0 0.0
    %1113 = vmatpush1.msra.mxu0 0.0
    %1114 = vmatprep.subr.mxu0 0.0
    %1115 = vmatpush1.msra.mxu0 0.0
    %1116 = vmatprep.subr.mxu0 0.0
    %1117 = vmatpush1.msra.mxu0 0.0
    %1118 = vmatprep.subr.mxu0 0.0
    %1119 = vmatpush1.msra.mxu0 0.0
    %1120 = vmatprep.subr.mxu0 0.0
    %1121 = vmatpush1.msra.mxu0 0.0
    %1122 = vmatprep.subr.mxu0 0.0
    %1123 = vmatpush1.msra.mxu0 0.0
    %1124 = vmatprep.subr.mxu0 0.0
    %1125 = vmatpush1.msra.mxu0 0.0
    %1126 = vmatprep.subr.mxu0 0.0
    %1127 = vmatpush1.msra.mxu0 0.0
    %1128 = vmatprep.subr.mxu0 0.0
    %1129 = vmatpush1.msra.mxu0 0.0
    %1130 = vmatprep.subr.mxu0 0.0
    %1131 = vmatpush1.msra.mxu0 0.0
    %1132 = vmatprep.subr.mxu0 0.0
    %1133 = vmatpush1.msra.mxu0 0.0
    %1134 = vmatprep.subr.mxu0 0.0
    %1135 = vmatpush1.msra.mxu0 0.0
    %1136 = vmatprep.subr.mxu0 0.0
    %1137 = vmatpush1.msra.mxu0 0.0
    %1138 = vmatprep.subr.mxu0 0.0
    %1139 = vmatpush1.msra.mxu0 0.0
    %1140 = vmatprep.subr.mxu0 0.0
    %1141 = vmatpush1.msra.mxu0 0.0
    %1142 = vmatprep.subr.mxu0 0.0
    %1143 = vmatpush1.msra.mxu0 0.0
    %1144 = vmatprep.subr.mxu0 0.0
    %1145 = vmatpush1.msra.mxu0 0.0
    %1146 = vmatprep.subr.mxu0 0.0
    %1147 = vmatpush1.msra.mxu0 0.0
    %1148 = vmatprep.subr.mxu0 0.0
    %1149 = vmatpush1.msra.mxu0 0.0
    %1150 = vmatprep.subr.mxu0 0.0
    %1151 = vmatpush1.msra.mxu0 0.0
    %1152 = vmatprep.subr.mxu0 0.0
    %1153 = vmatpush1.msra.mxu0 0.0
    %1154 = vmatprep.subr.mxu0 0.0
    %1155 = vmatpush1.msra.mxu0 0.0
    %1156 = vmatprep.subr.mxu0 0.0
    %1157 = vmatpush1.msra.mxu0 0.0
    %1158 = vmatprep.subr.mxu0 0.0
    %1159 = vmatpush1.msra.mxu0 0.0
    %1160 = vmatprep.subr.mxu0 0.0
    %1161 = vmatpush1.msra.mxu0 0.0
    %1162 = vmatprep.subr.mxu0 0.0
    %1163 = vmatpush1.msra.mxu0 0.0
    %1164 = vmatprep.subr.mxu0 0.0
    %1165 = vmatpush1.msra.mxu0 0.0
    %1166 = vmatprep.subr.mxu0 0.0
    %1167 = vmatpush1.msra.mxu0 0.0
    %1168 = vmatprep.subr.mxu0 0.0
    %1169 = vmatpush1.msra.mxu0 0.0
    %1170 = vmatprep.mubr.f32.mxu0 0.0
    %1171 = vmatmul.mubr.f32.gmra.mrb[0].mxu0 %v1101
    %v1172 = vpop.f32.mrb[0].mxu0
    %v1173 = vadd.f32 0.0, %v1172
    %v1174 = vpop.f32.mrb[0].mxu0
    %1175 = vmatprep.mubr.f32.mxu0 0.0
    %1176 = vmatmul.mubr.f32.gmra.mrb[0].mxu0 %v1104
    %v1177 = vpop.f32.mrb[0].mxu0
    %v1178 = vadd.f32 0.0, %v1177
    %v1179 = vpop.f32.mrb[0].mxu0
    %1180 = vdwg.mxu0
    %v1181 = vmul.f32 %v724, %v901
    %v1182 = vmul.f32 %v725, %v901
    %1183 = vrot.lane.b32.xlu0 %v255, 88
    %v1184 = vpop.permute.xlu0 %1183
    %1185 = vrot.lane.b32.xlu0 %v260, 88
    %v1186 = vpop.permute.xlu0 %1185
    %v1190 = vsel %vm59, %v1181, 0
    %v1193 = vsel %vm59, %v1182, 0
    %1195 = vmatprep.subr.mxu0 0.0
    %1196 = vmatpush1.msra.mxu0 %v1184
    %1197 = vmatprep.subr.mxu0 0.0
    %1198 = vmatpush1.msra.mxu0 %v1186
    %1199 = vmatprep.subr.mxu0 0.0
    %1200 = vmatpush1.msra.mxu0 0.0
    %1201 = vmatprep.subr.mxu0 0.0
    %1202 = vmatpush1.msra.mxu0 0.0
    %1203 = vmatprep.subr.mxu0 0.0
    %1204 = vmatpush1.msra.mxu0 0.0
    %1205 = vmatprep.subr.mxu0 0.0
    %1206 = vmatpush1.msra.mxu0 0.0
    %1207 = vmatprep.subr.mxu0 0.0
    %1208 = vmatpush1.msra.mxu0 0.0
    %1209 = vmatprep.subr.mxu0 0.0
    %1210 = vmatpush1.msra.mxu0 0.0
    %1211 = vmatprep.subr.mxu0 0.0
    %1212 = vmatpush1.msra.mxu0 0.0
    %1213 = vmatprep.subr.mxu0 0.0
    %1214 = vmatpush1.msra.mxu0 0.0
    %1215 = vmatprep.subr.mxu0 0.0
    %1216 = vmatpush1.msra.mxu0 0.0
    %1217 = vmatprep.subr.mxu0 0.0
    %1218 = vmatpush1.msra.mxu0 0.0
    %1219 = vmatprep.subr.mxu0 0.0
    %1220 = vmatpush1.msra.mxu0 0.0
    %1221 = vmatprep.subr.mxu0 0.0
    %1222 = vmatpush1.msra.mxu0 0.0
    %1223 = vmatprep.subr.mxu0 0.0
    %1224 = vmatpush1.msra.mxu0 0.0
    %1225 = vmatprep.subr.mxu0 0.0
    %1226 = vmatpush1.msra.mxu0 0.0
    %1227 = vmatprep.subr.mxu0 0.0
    %1228 = vmatpush1.msra.mxu0 0.0
    %1229 = vmatprep.subr.mxu0 0.0
    %1230 = vmatpush1.msra.mxu0 0.0
    %1231 = vmatprep.subr.mxu0 0.0
    %1232 = vmatpush1.msra.mxu0 0.0
    %1233 = vmatprep.subr.mxu0 0.0
    %1234 = vmatpush1.msra.mxu0 0.0
    %1235 = vmatprep.subr.mxu0 0.0
    %1236 = vmatpush1.msra.mxu0 0.0
    %1237 = vmatprep.subr.mxu0 0.0
    %1238 = vmatpush1.msra.mxu0 0.0
    %1239 = vmatprep.subr.mxu0 0.0
    %1240 = vmatpush1.msra.mxu0 0.0
    %1241 = vmatprep.subr.mxu0 0.0
    %1242 = vmatpush1.msra.mxu0 0.0
    %1243 = vmatprep.subr.mxu0 0.0
    %1244 = vmatpush1.msra.mxu0 0.0
    %1245 = vmatprep.subr.mxu0 0.0
    %1246 = vmatpush1.msra.mxu0 0.0
    %1247 = vmatprep.subr.mxu0 0.0
    %1248 = vmatpush1.msra.mxu0 0.0
    %1249 = vmatprep.subr.mxu0 0.0
    %1250 = vmatpush1.msra.mxu0 0.0
    %1251 = vmatprep.subr.mxu0 0.0
    %1252 = vmatpush1.msra.mxu0 0.0
    %1253 = vmatprep.subr.mxu0 0.0
    %1254 = vmatpush1.msra.mxu0 0.0
    %1255 = vmatprep.subr.mxu0 0.0
    %1256 = vmatpush1.msra.mxu0 0.0
    %1257 = vmatprep.subr.mxu0 0.0
    %1258 = vmatpush1.msra.mxu0 0.0
    %1259 = vmatprep.mubr.f32.mxu0 0.0
    %1260 = vmatmul.mubr.f32.gmra.mrb[0].mxu0 %v1190
    %v1261 = vpop.f32.mrb[0].mxu0
    %v1262 = vadd.f32 0.0, %v1261
    %v1263 = vpop.f32.mrb[0].mxu0
    %1264 = vmatprep.mubr.f32.mxu0 0.0
    %1265 = vmatmul.mubr.f32.gmra.mrb[0].mxu0 %v1193
    %v1266 = vpop.f32.mrb[0].mxu0
    %v1267 = vadd.f32 0.0, %v1266
    %v1268 = vpop.f32.mrb[0].mxu0
    %1269 = vdwg.mxu0
    %1272 = vrot.lane.b32.xlu0 %v1262, 8
    %v1273 = vpop.permute.xlu0 %1272
    %1274 = vrot.lane.b32.xlu0 %v1267, 8
    %v1275 = vpop.permute.xlu0 %1274
    %v1278 = vsel %vm269, %v1173, %v1273
    %v1279 = vsel %vm269, %v1178, %v1275
    %v1280 = vadd.f32 %v149, %v1278
    %v1281 = vadd.f32 %v154, %v1279
    %v1282 = vld [vmem:[%s9] sm:$0x1]
    %v1283 = vld [vmem:[%s10] sm:$0x1]
    %v1284 = vsel %vm59, %v1090, 0.0
    %1285 = vadd.xlane.f32.xlu0 %v1284
    %v1286 = vpop.xlane.xlu0 %1285
    %v1287 = vsel %vm59, %v1091, 0.0
    %1288 = vadd.xlane.f32.xlu0 %v1287
    %v1289 = vpop.xlane.xlu0 %1288
    %v1290 = vsel %vm59, %v1280, 0.0
    %1291 = vadd.xlane.f32.xlu0 %v1290
    %v1292 = vpop.xlane.xlu0 %1291
    %v1293 = vsel %vm59, %v1281, 0.0
    %1294 = vadd.xlane.f32.xlu0 %v1293
    %v1295 = vpop.xlane.xlu0 %1294
    %v1296 = vrcp.pop 16.0
    %v1297 = vmul.f32 %v1286, %v1296
    %v1298 = vmul.f32 %v1289, %v1296
    %v1299 = vmul.f32 %v1292, %v1296
    %v1300 = vmul.f32 %v1295, %v1296
    %v1301 = vsub.f32 %v1090, %v1297
    %v1302 = vsub.f32 %v1091, %v1298
    %v1303 = vsub.f32 %v1280, %v1299
    %v1304 = vsub.f32 %v1281, %v1300
    %v1305 = vmul.f32 %v1301, %v1301
    %v1306 = vmul.f32 %v1302, %v1302
    %v1307 = vmul.f32 %v1303, %v1303
    %v1308 = vmul.f32 %v1304, %v1304
    %v1309 = vsel %vm59, %v1305, 0.0
    %1310 = vadd.xlane.f32.xlu0 %v1309
    %v1311 = vpop.xlane.xlu0 %1310
    %v1312 = vsel %vm59, %v1306, 0.0
    %1313 = vadd.xlane.f32.xlu0 %v1312
    %v1314 = vpop.xlane.xlu0 %1313
    %v1315 = vsel %vm59, %v1307, 0.0
    %1316 = vadd.xlane.f32.xlu0 %v1315
    %v1317 = vpop.xlane.xlu0 %1316
    %v1318 = vsel %vm59, %v1308, 0.0
    %1319 = vadd.xlane.f32.xlu0 %v1318
    %v1320 = vpop.xlane.xlu0 %1319
    %v1321 = vmul.f32 %v1311, %v1296
    %v1322 = vmul.f32 %v1314, %v1296
    %v1323 = vmul.f32 %v1317, %v1296
    %v1324 = vmul.f32 %v1320, %v1296
    %v1325 = vadd.f32 %v1321, 1e-05
    %v1326 = vadd.f32 %v1322, 1e-05
    %v1327 = vadd.f32 %v1323, 1e-05
    %v1328 = vadd.f32 %v1324, 1e-05
    %v1329 = vrsqrt.pop %v1325
    %v1330 = vrsqrt.pop %v1326
    %v1331 = vrsqrt.pop %v1327
    %v1332 = vrsqrt.pop %v1328
    %v1333 = vmul.f32 %v1301, %v1329
    %v1334 = vmul.f32 %v1302, %v1330
    %v1335 = vmul.f32 %v1303, %v1331
    %v1336 = vmul.f32 %v1304, %v1332
    %v1338 = vlaneseq
    %v1339 = vshrl.u32 %v1338, 7
    %v1340 = vsub.s32 0, %v1339
    %v1341 = vrot.slane %v1282, %v1340
    %v1343 = vmul.f32 %v1333, %v1341
    %v1344 = vmul.f32 %v1334, %v1341
    %v1345 = vmul.f32 %v1335, %v1341
    %v1346 = vmul.f32 %v1336, %v1341
    %v1348 = vlaneseq
    %v1349 = vshrl.u32 %v1348, 7
    %v1350 = vsub.s32 0, %v1349
    %v1351 = vrot.slane %v1283, %v1350
    %v1353 = vadd.f32 %v1343, %v1351
    %v1354 = vadd.f32 %v1344, %v1351
    %v1355 = vadd.f32 %v1345, %v1351
    %v1356 = vadd.f32 %v1346, %v1351
    %v1357 = vld [vmem:[%s5] sm:$0xff]
    %v1358 = vld [vmem:[%s5 + $0x8] sm:$0xff]
    %v1359 = vld [vmem:[%s6] sm:$0x1]
    %v1361 = vlaneseq
    %v1362 = vshrl.u32 %v1361, 7
    %v1363 = vsub.s32 0, %v1362
    %v1364 = vrot.slane %v1359, %v1363
    %v1367 = vsel %vm59, %v1353, 0
    %v1370 = vsel %vm59, %v1354, 0
    %v1373 = vsel %vm59, %v1355, 0
    %v1376 = vsel %vm59, %v1356, 0
    %1378 = vmatprep.subr.mxu0 0.0
    %1379 = vmatpush1.msra.mxu0 %v1357
    %1380 = vmatprep.subr.mxu0 0.0
    %1381 = vmatpush1.msra.mxu0 %v1358
    %1382 = vmatprep.subr.mxu0 0.0
    %1383 = vmatpush1.msra.mxu0 0.0
    %1384 = vmatprep.subr.mxu0 0.0
    %1385 = vmatpush1.msra.mxu0 0.0
    %1386 = vmatprep.subr.mxu0 0.0
    %1387 = vmatpush1.msra.mxu0 0.0
    %1388 = vmatprep.subr.mxu0 0.0
    %1389 = vmatpush1.msra.mxu0 0.0
    %1390 = vmatprep.subr.mxu0 0.0
    %1391 = vmatpush1.msra.mxu0 0.0
    %1392 = vmatprep.subr.mxu0 0.0
    %1393 = vmatpush1.msra.mxu0 0.0
    %1394 = vmatprep.subr.mxu0 0.0
    %1395 = vmatpush1.msra.mxu0 0.0
    %1396 = vmatprep.subr.mxu0 0.0
    %1397 = vmatpush1.msra.mxu0 0.0
    %1398 = vmatprep.subr.mxu0 0.0
    %1399 = vmatpush1.msra.mxu0 0.0
    %1400 = vmatprep.subr.mxu0 0.0
    %1401 = vmatpush1.msra.mxu0 0.0
    %1402 = vmatprep.subr.mxu0 0.0
    %1403 = vmatpush1.msra.mxu0 0.0
    %1404 = vmatprep.subr.mxu0 0.0
    %1405 = vmatpush1.msra.mxu0 0.0
    %1406 = vmatprep.subr.mxu0 0.0
    %1407 = vmatpush1.msra.mxu0 0.0
    %1408 = vmatprep.subr.mxu0 0.0
    %1409 = vmatpush1.msra.mxu0 0.0
    %1410 = vmatprep.subr.mxu0 0.0
    %1411 = vmatpush1.msra.mxu0 0.0
    %1412 = vmatprep.subr.mxu0 0.0
    %1413 = vmatpush1.msra.mxu0 0.0
    %1414 = vmatprep.subr.mxu0 0.0
    %1415 = vmatpush1.msra.mxu0 0.0
    %1416 = vmatprep.subr.mxu0 0.0
    %1417 = vmatpush1.msra.mxu0 0.0
    %1418 = vmatprep.subr.mxu0 0.0
    %1419 = vmatpush1.msra.mxu0 0.0
    %1420 = vmatprep.subr.mxu0 0.0
    %1421 = vmatpush1.msra.mxu0 0.0
    %1422 = vmatprep.subr.mxu0 0.0
    %1423 = vmatpush1.msra.mxu0 0.0
    %1424 = vmatprep.subr.mxu0 0.0
    %1425 = vmatpush1.msra.mxu0 0.0
    %1426 = vmatprep.subr.mxu0 0.0
    %1427 = vmatpush1.msra.mxu0 0.0
    %1428 = vmatprep.subr.mxu0 0.0
    %1429 = vmatpush1.msra.mxu0 0.0
    %1430 = vmatprep.subr.mxu0 0.0
    %1431 = vmatpush1.msra.mxu0 0.0
    %1432 = vmatprep.subr.mxu0 0.0
    %1433 = vmatpush1.msra.mxu0 0.0
    %1434 = vmatprep.subr.mxu0 0.0
    %1435 = vmatpush1.msra.mxu0 0.0
    %1436 = vmatprep.subr.mxu0 0.0
    %1437 = vmatpush1.msra.mxu0 0.0
    %1438 = vmatprep.subr.mxu0 0.0
    %1439 = vmatpush1.msra.mxu0 0.0
    %1440 = vmatprep.subr.mxu0 0.0
    %1441 = vmatpush1.msra.mxu0 0.0
    %1442 = vmatprep.mubr.f32.mxu0 0.0
    %1443 = vmatmul.mubr.f32.gmra.mrb[0].mxu0 %v1367
    %v1444 = vpop.f32.mrb[0].mxu0
    %v1445 = vadd.f32 %v1364, %v1444
    %v1446 = vpop.f32.mrb[0].mxu0
    %1447 = vmatprep.mubr.f32.mxu0 0.0
    %1448 = vmatmul.mubr.f32.gmra.mrb[0].mxu0 %v1370
    %v1449 = vpop.f32.mrb[0].mxu0
    %v1450 = vadd.f32 %v1364, %v1449
    %v1451 = vpop.f32.mrb[0].mxu0
    %1452 = vmatprep.mubr.f32.mxu0 0.0
    %1453 = vmatmul.mubr.f32.gmra.mrb[0].mxu0 %v1373
    %v1454 = vpop.f32.mrb[0].mxu0
    %v1455 = vadd.f32 %v1364, %v1454
    %v1456 = vpop.f32.mrb[0].mxu0
    %1457 = vmatprep.mubr.f32.mxu0 0.0
    %1458 = vmatmul.mubr.f32.gmra.mrb[0].mxu0 %v1376
    %v1459 = vpop.f32.mrb[0].mxu0
    %v1460 = vadd.f32 %v1364, %v1459
    %v1461 = vpop.f32.mrb[0].mxu0
    %1462 = vdwg.mxu0
    %v1463 = vmax.f32 %v1445, 0.0
    %v1464 = vmax.f32 %v1450, 0.0
    %v1465 = vmax.f32 %v1455, 0.0
    %v1466 = vmax.f32 %v1460, 0.0
    %v1467 = vld [vmem:[%s7] sm:$0xff]
    %v1468 = vld [vmem:[%s7 + $0x8] sm:$0xff]
    %v1469 = vld [vmem:[%s8] sm:$0x1]
    %v1471 = vlaneseq
    %v1472 = vshrl.u32 %v1471, 7
    %v1473 = vsub.s32 0, %v1472
    %v1474 = vrot.slane %v1469, %v1473
    %v1477 = vsel %vm59, %v1463, 0
    %v1480 = vsel %vm59, %v1464, 0
    %v1483 = vsel %vm59, %v1465, 0
    %v1486 = vsel %vm59, %v1466, 0
    %1488 = vmatprep.subr.mxu0 0.0
    %1489 = vmatpush1.msra.mxu0 %v1467
    %1490 = vmatprep.subr.mxu0 0.0
    %1491 = vmatpush1.msra.mxu0 %v1468
    %1492 = vmatprep.subr.mxu0 0.0
    %1493 = vmatpush1.msra.mxu0 0.0
    %1494 = vmatprep.subr.mxu0 0.0
    %1495 = vmatpush1.msra.mxu0 0.0
    %1496 = vmatprep.subr.mxu0 0.0
    %1497 = vmatpush1.msra.mxu0 0.0
    %1498 = vmatprep.subr.mxu0 0.0
    %1499 = vmatpush1.msra.mxu0 0.0
    %1500 = vmatprep.subr.mxu0 0.0
    %1501 = vmatpush1.msra.mxu0 0.0
    %1502 = vmatprep.subr.mxu0 0.0
    %1503 = vmatpush1.msra.mxu0 0.0
    %1504 = vmatprep.subr.mxu0 0.0
    %1505 = vmatpush1.msra.mxu0 0.0
    %1506 = vmatprep.subr.mxu0 0.0
    %1507 = vmatpush1.msra.mxu0 0.0
    %1508 = vmatprep.subr.mxu0 0.0
    %1509 = vmatpush1.msra.mxu0 0.0
    %1510 = vmatprep.subr.mxu0 0.0
    %1511 = vmatpush1.msra.mxu0 0.0
    %1512 = vmatprep.subr.mxu0 0.0
    %1513 = vmatpush1.msra.mxu0 0.0
    %1514 = vmatprep.subr.mxu0 0.0
    %1515 = vmatpush1.msra.mxu0 0.0
    %1516 = vmatprep.subr.mxu0 0.0
    %1517 = vmatpush1.msra.mxu0 0.0
    %1518 = vmatprep.subr.mxu0 0.0
    %1519 = vmatpush1.msra.mxu0 0.0
    %1520 = vmatprep.subr.mxu0 0.0
    %1521 = vmatpush1.msra.mxu0 0.0
    %1522 = vmatprep.subr.mxu0 0.0
    %1523 = vmatpush1.msra.mxu0 0.0
    %1524 = vmatprep.subr.mxu0 0.0
    %1525 = vmatpush1.msra.mxu0 0.0
    %1526 = vmatprep.subr.mxu0 0.0
    %1527 = vmatpush1.msra.mxu0 0.0
    %1528 = vmatprep.subr.mxu0 0.0
    %1529 = vmatpush1.msra.mxu0 0.0
    %1530 = vmatprep.subr.mxu0 0.0
    %1531 = vmatpush1.msra.mxu0 0.0
    %1532 = vmatprep.subr.mxu0 0.0
    %1533 = vmatpush1.msra.mxu0 0.0
    %1534 = vmatprep.subr.mxu0 0.0
    %1535 = vmatpush1.msra.mxu0 0.0
    %1536 = vmatprep.subr.mxu0 0.0
    %1537 = vmatpush1.msra.mxu0 0.0
    %1538 = vmatprep.subr.mxu0 0.0
    %1539 = vmatpush1.msra.mxu0 0.0
    %1540 = vmatprep.subr.mxu0 0.0
    %1541 = vmatpush1.msra.mxu0 0.0
    %1542 = vmatprep.subr.mxu0 0.0
    %1543 = vmatpush1.msra.mxu0 0.0
    %1544 = vmatprep.subr.mxu0 0.0
    %1545 = vmatpush1.msra.mxu0 0.0
    %1546 = vmatprep.subr.mxu0 0.0
    %1547 = vmatpush1.msra.mxu0 0.0
    %1548 = vmatprep.subr.mxu0 0.0
    %1549 = vmatpush1.msra.mxu0 0.0
    %1550 = vmatprep.subr.mxu0 0.0
    %1551 = vmatpush1.msra.mxu0 0.0
    %1552 = vmatprep.mubr.f32.mxu0 0.0
    %1553 = vmatmul.mubr.f32.gmra.mrb[0].mxu0 %v1477
    %v1554 = vpop.f32.mrb[0].mxu0
    %v1555 = vadd.f32 %v1474, %v1554
    %v1556 = vpop.f32.mrb[0].mxu0
    %1557 = vmatprep.mubr.f32.mxu0 0.0
    %1558 = vmatmul.mubr.f32.gmra.mrb[0].mxu0 %v1480
    %v1559 = vpop.f32.mrb[0].mxu0
    %v1560 = vadd.f32 %v1474, %v1559
    %v1561 = vpop.f32.mrb[0].mxu0
    %1562 = vmatprep.mubr.f32.mxu0 0.0
    %1563 = vmatmul.mubr.f32.gmra.mrb[0].mxu0 %v1483
    %v1564 = vpop.f32.mrb[0].mxu0
    %v1565 = vadd.f32 %v1474, %v1564
    %v1566 = vpop.f32.mrb[0].mxu0
    %1567 = vmatprep.mubr.f32.mxu0 0.0
    %1568 = vmatmul.mubr.f32.gmra.mrb[0].mxu0 %v1486
    %v1569 = vpop.f32.mrb[0].mxu0
    %v1570 = vadd.f32 %v1474, %v1569
    %v1571 = vpop.f32.mrb[0].mxu0
    %1572 = vdwg.mxu0
    %v1573 = vadd.f32 %v1353, %v1555
    %v1574 = vadd.f32 %v1354, %v1560
    %v1575 = vadd.f32 %v1355, %v1565
    %v1576 = vadd.f32 %v1356, %v1570
    %v1577 = vld [vmem:[%s11] sm:$0x1]
    %v1578 = vld [vmem:[%s12] sm:$0x1]
    %v1579 = vsel %vm59, %v1573, 0.0
    %1580 = vadd.xlane.f32.xlu0 %v1579
    %v1581 = vpop.xlane.xlu0 %1580
    %v1582 = vsel %vm59, %v1574, 0.0
    %1583 = vadd.xlane.f32.xlu0 %v1582
    %v1584 = vpop.xlane.xlu0 %1583
    %v1585 = vsel %vm59, %v1575, 0.0
    %1586 = vadd.xlane.f32.xlu0 %v1585
    %v1587 = vpop.xlane.xlu0 %1586
    %v1588 = vsel %vm59, %v1576, 0.0
    %1589 = vadd.xlane.f32.xlu0 %v1588
    %v1590 = vpop.xlane.xlu0 %1589
    %v1591 = vmul.f32 %v1581, %v1296
    %v1592 = vmul.f32 %v1584, %v1296
    %v1593 = vmul.f32 %v1587, %v1296
    %v1594 = vmul.f32 %v1590, %v1296
    %v1595 = vsub.f32 %v1573, %v1591
    %v1596 = vsub.f32 %v1574, %v1592
    %v1597 = vsub.f32 %v1575, %v1593
    %v1598 = vsub.f32 %v1576, %v1594
    %v1599 = vmul.f32 %v1595, %v1595
    %v1600 = vmul.f32 %v1596, %v1596
    %v1601 = vmul.f32 %v1597, %v1597
    %v1602 = vmul.f32 %v1598, %v1598
    %v1603 = vsel %vm59, %v1599, 0.0
    %1604 = vadd.xlane.f32.xlu0 %v1603
    %v1605 = vpop.xlane.xlu0 %1604
    %v1606 = vsel %vm59, %v1600, 0.0
    %1607 = vadd.xlane.f32.xlu0 %v1606
    %v1608 = vpop.xlane.xlu0 %1607
    %v1609 = vsel %vm59, %v1601, 0.0
    %1610 = vadd.xlane.f32.xlu0 %v1609
    %v1611 = vpop.xlane.xlu0 %1610
    %v1612 = vsel %vm59, %v1602, 0.0
    %1613 = vadd.xlane.f32.xlu0 %v1612
    %v1614 = vpop.xlane.xlu0 %1613
    %v1615 = vmul.f32 %v1605, %v1296
    %v1616 = vmul.f32 %v1608, %v1296
    %v1617 = vmul.f32 %v1611, %v1296
    %v1618 = vmul.f32 %v1614, %v1296
    %v1619 = vadd.f32 %v1615, 1e-05
    %v1620 = vadd.f32 %v1616, 1e-05
    %v1621 = vadd.f32 %v1617, 1e-05
    %v1622 = vadd.f32 %v1618, 1e-05
    %v1623 = vrsqrt.pop %v1619
    %v1624 = vrsqrt.pop %v1620
    %v1625 = vrsqrt.pop %v1621
    %v1626 = vrsqrt.pop %v1622
    %v1627 = vmul.f32 %v1595, %v1623
    %v1628 = vmul.f32 %v1596, %v1624
    %v1629 = vmul.f32 %v1597, %v1625
    %v1630 = vmul.f32 %v1598, %v1626
    %v1632 = vlaneseq
    %v1633 = vshrl.u32 %v1632, 7
    %v1634 = vsub.s32 0, %v1633
    %v1635 = vrot.slane %v1577, %v1634
    %v1637 = vmul.f32 %v1627, %v1635
    %v1638 = vmul.f32 %v1628, %v1635
    %v1639 = vmul.f32 %v1629, %v1635
    %v1640 = vmul.f32 %v1630, %v1635
    %v1642 = vlaneseq
    %v1643 = vshrl.u32 %v1642, 7
    %v1644 = vsub.s32 0, %v1643
    %v1645 = vrot.slane %v1578, %v1644
    %v1647 = vadd.f32 %v1637, %v1645
    %v1648 = vadd.f32 %v1638, %v1645
    %v1649 = vadd.f32 %v1639, %v1645
    %v1650 = vadd.f32 %v1640, %v1645
    %v1651 = vmul.f32 %v752, %v896
    %v1653 = vsel %vm59, %v1651, 0
    %1655 = vmatprep.subr.mxu0 0.0
    %1656 = vmatpush1.msra.mxu0 %v1647
    %1657 = vmatprep.subr.mxu0 0.0
    %1658 = vmatpush1.msra.mxu0 %v1648
    %1659 = vmatprep.subr.mxu0 0.0
    %1660 = vmatpush1.msra.mxu0 0.0
    %1661 = vmatprep.subr.mxu0 0.0
    %1662 = vmatpush1.msra.mxu0 0.0
    %1663 = vmatprep.subr.mxu0 0.0
    %1664 = vmatpush1.msra.mxu0 0.0
    %1665 = vmatprep.subr.mxu0 0.0
    %1666 = vmatpush1.msra.mxu0 0.0
    %1667 = vmatprep.subr.mxu0 0.0
    %1668 = vmatpush1.msra.mxu0 0.0
    %1669 = vmatprep.subr.mxu0 0.0
    %1670 = vmatpush1.msra.mxu0 0.0
    %1671 = vmatprep.subr.mxu0 0.0
    %1672 = vmatpush1.msra.mxu0 0.0
    %1673 = vmatprep.subr.mxu0 0.0
    %1674 = vmatpush1.msra.mxu0 0.0
    %1675 = vmatprep.subr.mxu0 0.0
    %1676 = vmatpush1.msra.mxu0 0.0
    %1677 = vmatprep.subr.mxu0 0.0
    %1678 = vmatpush1.msra.mxu0 0.0
    %1679 = vmatprep.subr.mxu0 0.0
    %1680 = vmatpush1.msra.mxu0 0.0
    %1681 = vmatprep.subr.mxu0 0.0
    %1682 = vmatpush1.msra.mxu0 0.0
    %1683 = vmatprep.subr.mxu0 0.0
    %1684 = vmatpush1.msra.mxu0 0.0
    %1685 = vmatprep.subr.mxu0 0.0
    %1686 = vmatpush1.msra.mxu0 0.0
    %1687 = vmatprep.subr.mxu0 0.0
    %1688 = vmatpush1.msra.mxu0 0.0
    %1689 = vmatprep.subr.mxu0 0.0
    %1690 = vmatpush1.msra.mxu0 0.0
    %1691 = vmatprep.subr.mxu0 0.0
    %1692 = vmatpush1.msra.mxu0 0.0
    %1693 = vmatprep.subr.mxu0 0.0
    %1694 = vmatpush1.msra.mxu0 0.0
    %1695 = vmatprep.subr.mxu0 0.0
    %1696 = vmatpush1.msra.mxu0 0.0
    %1697 = vmatprep.subr.mxu0 0.0
    %1698 = vmatpush1.msra.mxu0 0.0
    %1699 = vmatprep.subr.mxu0 0.0
    %1700 = vmatpush1.msra.mxu0 0.0
    %1701 = vmatprep.subr.mxu0 0.0
    %1702 = vmatpush1.msra.mxu0 0.0
    %1703 = vmatprep.subr.mxu0 0.0
    %1704 = vmatpush1.msra.mxu0 0.0
    %1705 = vmatprep.subr.mxu0 0.0
    %1706 = vmatpush1.msra.mxu0 0.0
    %1707 = vmatprep.subr.mxu0 0.0
    %1708 = vmatpush1.msra.mxu0 0.0
    %1709 = vmatprep.subr.mxu0 0.0
    %1710 = vmatpush1.msra.mxu0 0.0
    %1711 = vmatprep.subr.mxu0 0.0
    %1712 = vmatpush1.msra.mxu0 0.0
    %1713 = vmatprep.subr.mxu0 0.0
    %1714 = vmatpush1.msra.mxu0 0.0
    %1715 = vmatprep.subr.mxu0 0.0
    %1716 = vmatpush1.msra.mxu0 0.0
    %1717 = vmatprep.subr.mxu0 0.0
    %1718 = vmatpush1.msra.mxu0 0.0
    %1719 = vmatprep.mubr.f32.mxu0 0.0
    %1720 = vmatmul.mubr.f32.gmra.mrb[0].mxu0 %v1653
    %v1721 = vpop.f32.mrb[0].mxu0
    %v1722 = vadd.f32 0.0, %v1721
    %v1723 = vpop.f32.mrb[0].mxu0
    %1724 = vdwg.mxu0
    %1725 = vmatprep.subr.mxu0 0.0
    %1726 = vmatpush1.msra.mxu0 %v1649
    %1727 = vmatprep.subr.mxu0 0.0
    %1728 = vmatpush1.msra.mxu0 %v1650
    %1729 = vmatprep.subr.mxu0 0.0
    %1730 = vmatpush1.msra.mxu0 0.0
    %1731 = vmatprep.subr.mxu0 0.0
    %1732 = vmatpush1.msra.mxu0 0.0
    %1733 = vmatprep.subr.mxu0 0.0
    %1734 = vmatpush1.msra.mxu0 0.0
    %1735 = vmatprep.subr.mxu0 0.0
    %1736 = vmatpush1.msra.mxu0 0.0
    %1737 = vmatprep.subr.mxu0 0.0
    %1738 = vmatpush1.msra.mxu0 0.0
    %1739 = vmatprep.subr.mxu0 0.0
    %1740 = vmatpush1.msra.mxu0 0.0
    %1741 = vmatprep.subr.mxu0 0.0
    %1742 = vmatpush1.msra.mxu0 0.0
    %1743 = vmatprep.subr.mxu0 0.0
    %1744 = vmatpush1.msra.mxu0 0.0
    %1745 = vmatprep.subr.mxu0 0.0
    %1746 = vmatpush1.msra.mxu0 0.0
    %1747 = vmatprep.subr.mxu0 0.0
    %1748 = vmatpush1.msra.mxu0 0.0
    %1749 = vmatprep.subr.mxu0 0.0
    %1750 = vmatpush1.msra.mxu0 0.0
    %1751 = vmatprep.subr.mxu0 0.0
    %1752 = vmatpush1.msra.mxu0 0.0
    %1753 = vmatprep.subr.mxu0 0.0
    %1754 = vmatpush1.msra.mxu0 0.0
    %1755 = vmatprep.subr.mxu0 0.0
    %1756 = vmatpush1.msra.mxu0 0.0
    %1757 = vmatprep.subr.mxu0 0.0
    %1758 = vmatpush1.msra.mxu0 0.0
    %1759 = vmatprep.subr.mxu0 0.0
    %1760 = vmatpush1.msra.mxu0 0.0
    %1761 = vmatprep.subr.mxu0 0.0
    %1762 = vmatpush1.msra.mxu0 0.0
    %1763 = vmatprep.subr.mxu0 0.0
    %1764 = vmatpush1.msra.mxu0 0.0
    %1765 = vmatprep.subr.mxu0 0.0
    %1766 = vmatpush1.msra.mxu0 0.0
    %1767 = vmatprep.subr.mxu0 0.0
    %1768 = vmatpush1.msra.mxu0 0.0
    %1769 = vmatprep.subr.mxu0 0.0
    %1770 = vmatpush1.msra.mxu0 0.0
    %1771 = vmatprep.subr.mxu0 0.0
    %1772 = vmatpush1.msra.mxu0 0.0
    %1773 = vmatprep.subr.mxu0 0.0
    %1774 = vmatpush1.msra.mxu0 0.0
    %1775 = vmatprep.subr.mxu0 0.0
    %1776 = vmatpush1.msra.mxu0 0.0
    %1777 = vmatprep.subr.mxu0 0.0
    %1778 = vmatpush1.msra.mxu0 0.0
    %1779 = vmatprep.subr.mxu0 0.0
    %1780 = vmatpush1.msra.mxu0 0.0
    %1781 = vmatprep.subr.mxu0 0.0
    %1782 = vmatpush1.msra.mxu0 0.0
    %1783 = vmatprep.subr.mxu0 0.0
    %1784 = vmatpush1.msra.mxu0 0.0
    %1785 = vmatprep.subr.mxu0 0.0
    %1786 = vmatpush1.msra.mxu0 0.0
    %1787 = vmatprep.subr.mxu0 0.0
    %1788 = vmatpush1.msra.mxu0 0.0
    %1789 = vmatprep.mubr.f32.mxu0 0.0
    %1790 = vmatmul.mubr.f32.gmra.mrb[0].mxu0 %v1653
    %v1791 = vpop.f32.mrb[0].mxu0
    %v1792 = vadd.f32 0.0, %v1791
    %v1793 = vpop.f32.mrb[0].mxu0
    %1794 = vdwg.mxu0
    %v1796 = vrot.slane %v1792, 7
    %vm1798 = vcmask 1040384
    %v1799 = vsel %vm1798, %v1722, %v1796
    %vm1800 = vcmask 123904
    %1801 = vst.msk [vmem:[#allocation2] sm:$0x3] %vm1800, %v1799
    // Predicated region
    $region61: #{sapl_forward.1} parent=1 // pred_check
      _
    $region62: #{sapl_forward.1} parent=1 // pred_check_branch
      %1803 = sbr.rel (0) target = $region64
    $region63: #{sapl_forward.1} parent=1 // pred_region
      %s1805 = ssub.s32 32, 32
      %1806 = vsyncadd [#allocation3], %s1805
      %s1808 = sshll.u32 [#allocation2], 4
      %s1809 = int_to_ptr.vmem [resolvable:$true] %s1808
      %1811 = dma.vmem_to_hbm [thread:$0]  %s1809, 32, %s13, [#allocation3]
    $region64: #{sapl_forward.1} parent=1 // pred_fallthru
      _
    // Predicated region
    $region65: #{sapl_forward.1} parent=1 // pred_check
      _
    $region66: #{sapl_forward.1} parent=1 // pred_check_branch
      %1813 = sbr.rel (0) target = $region68
    $region67: #{sapl_forward.1} parent=1 // pred_region
      %s1815 = ssub.s32 256, 256
      %1816 = vsyncadd [#allocation5], %s1815
      %s1817 = sshll.u32 [#allocation4], 4
      %s1818 = int_to_ptr.vmem [resolvable:$true] %s1817
      %1823 = dma.vmem_to_hbm [thread:$0]  %s1818, 256, %s14, [#allocation5], 128, 128, 8
    $region68: #{sapl_forward.1} parent=1 // pred_fallthru
      _
    // Predicated region
    $region69: #{sapl_forward.1} parent=1 // pred_check
      _
    $region70: #{sapl_forward.1} parent=1 // pred_check_branch
      %1825 = sbr.rel (0) target = $region72
    $region71: #{sapl_forward.1} parent=1 // pred_region
      _
    $region72: #{sapl_forward.1} parent=1 // pred_fallthru
      _
    // Predicated region
    $region73: #{sapl_forward.1} parent=1 // pred_check
      _
    $region74: #{sapl_forward.1} parent=1 // pred_check_branch
      %1827 = sbr.rel (0) target = $region76
    $region75: #{sapl_forward.1} parent=1 // pred_region
      %1828 = dma.done [#allocation3], 32
    $region76: #{sapl_forward.1} parent=1 // pred_fallthru
      _
    // Predicated region
    $region77: #{sapl_forward.1} parent=1 // pred_check
      _
    $region78: #{sapl_forward.1} parent=1 // pred_check_branch
      %1830 = sbr.rel (0) target = $region80
    $region79: #{sapl_forward.1} parent=1 // pred_region
      %1831 = dma.done [#allocation5], 256
    $region80: #{sapl_forward.1} parent=1 // pred_fallthru
      _
    // Predicated region
    $region81: #{sapl_forward.1} parent=1 // pred_check
      _
    $region82: #{sapl_forward.1} parent=1 // pred_check_branch
      %1833 = sbr.rel (0) target = $region84
    $region83: #{sapl_forward.1} parent=1 // pred_region
      _
    $region84: #{sapl_forward.1} parent=1 // pred_fallthru
      _
    %1834 = vsyncpa [#allocation3], 1
    %1835 = vsyncpa [#allocation5], 1

</llo_original>
